<compile_context>
chip_gen: v7x
topology: tpu7x:2x2x1
jax: 0.10.0
libtpu: 0.0.40
codegen_flags: <defaults>
</compile_context>

<pallas_src>
import functools

import jax
import jax.numpy as jnp
import numpy as np
from jax import lax
from jax.experimental import pallas as pl
from jax.experimental.pallas import tpu as pltpu


def _ghost_bottleneck_kernel(x_ref, w1_ref, b1_ref, wd1_ref, bd1_ref,
                             w2a_ref, w2b_ref, b2_ref, wd2_ref, bd2_ref,
                             mask_ref, o_ref, pad1_ref, pad2_ref, *, H, W):
    """Fused GhostBottleneck (s=1) for one batch element.

    x_ref:    (1, c1, H*W)        lane-dense NCHW input (spatial flattened)
    w1_ref:   (cA, c1)            GhostConv1.cv1 1x1 weights (BN folded)
    b1_ref:   (cA, 1)
    wd1_ref:  (cA, 25)            GhostConv1.cv2 depthwise 5x5 taps (kh*5+kw)
    bd1_ref:  (cA, 1)
    w2a_ref:  (cB, cA)            GhostConv2.cv1 weights for the y1 half
    w2b_ref:  (cB, cA)            GhostConv2.cv1 weights for the y2 half
    b2_ref:   (cB, 1)
    wd2_ref:  (cB, 25)            GhostConv2.cv2 depthwise taps
    bd2_ref:  (cB, 1)
    mask_ref: (5, H*W)            column-validity masks per kw offset
    o_ref:    (1, c2, H*W)
    pad1/2:   (c, H*W + 2*PAD)    zero-bordered flat line buffers (VMEM scratch)
    """
    HW = H * W
    PAD = 2 * W + 2                      # covers max |dh*W + dw| of a 5x5 window
    f32 = jnp.float32

    c1 = x_ref.shape[1]
    cA = w1_ref.shape[0]
    cB = w2a_ref.shape[0]

    xv = x_ref[0].astype(f32)            # (c1, HW), lane-dense

    def silu(t):
        return t * jax.nn.sigmoid(t)

    def pointwise(row_of, cin, w_ref, cout):
        # 1x1 conv as Cin broadcast-MAC passes on the VPU: (cout,1) * (1,HW).
        acc = jnp.zeros((cout, HW), f32)
        for c in range(cin):
            acc = acc + w_ref[:, pl.ds(c, 1)] * row_of(c)
        return acc

    def dwconv5(src, scr_ref, wd_ref):
        # Depthwise 5x5 (pad=2) on (C, HW): write src into a zero-bordered flat
        # buffer, then read the 25 shifted windows as Ref-window slices.
        scr_ref[...] = jnp.zeros(scr_ref.shape, f32)
        scr_ref[:, pl.ds(PAD, HW)] = src
        acc = jnp.zeros(src.shape, f32)
        for kw in range(5):
            dcol = kw - 2
            part = jnp.zeros(src.shape, f32)
            for kh in range(5):
                drow = kh - 2
                off = PAD + drow * W + dcol
                tap = wd_ref[:, pl.ds(kh * 5 + kw, 1)]       # (C, 1)
                part = part + scr_ref[:, pl.ds(off, HW)] * tap
            if dcol != 0:  # zero columns whose source wrapped across a row
                part = part * mask_ref[pl.ds(kw, 1), :]
            acc = acc + part
        return acc

    # --- GhostConv1 (act = SiLU) ---
    y1 = silu(pointwise(lambda c: xv[c:c + 1, :], c1, w1_ref, cA) + b1_ref[...])
    y2 = silu(dwconv5(y1, pad1_ref, wd1_ref) + bd1_ref[...])

    # --- GhostConv2 (no act); its 1x1 acts on cat([y1, y2]) -> split weights ---
    z1 = (pointwise(lambda c: y1[c:c + 1, :], cA, w2a_ref, cB)
          + pointwise(lambda c: y2[c:c + 1, :], cA, w2b_ref, cB)
          + b2_ref[...])
    z2 = dwconv5(z1, pad2_ref, wd2_ref) + bd2_ref[...]

    # --- cat([z1, z2], channel) + identity shortcut; lane-dense stores ---
    o_ref[:, 0:cB, :] = (z1 + xv[0:cB, :])[None].astype(o_ref.dtype)
    o_ref[:, cB:, :] = (z2 + xv[cB:, :])[None].astype(o_ref.dtype)


def _fold_bn(w, bn, eps):
    """Fold eval-mode BatchNorm (gamma, beta, mean, var) into conv weight/bias."""
    gamma, beta, mean, var = bn
    s = gamma / jnp.sqrt(var + eps)
    return w * s.reshape(-1, 1, 1, 1), beta - mean * s


def ghost_bottleneck(x, params, eps=1e-5):
    """Forward pass of GhostBottleneck(c1, c2, k=3, s=1) in eval mode.

    x: (N, c1, H, W); params hold PyTorch-layout conv weights + BN stats.
    """
    N, c1, H, W = x.shape
    cA = params["w_g1_pw"].shape[0]
    cB = params["w_g2_pw"].shape[0]
    c2 = 2 * cB
    if c1 != c2:
        raise ValueError("stride-1 GhostBottleneck identity shortcut needs c1 == c2")
    HW = H * W
    PAD = 2 * W + 2

    # ---- glue: fold BN, repack weights (tiny tensors, plain JAX) ----
    w1, b1 = _fold_bn(params["w_g1_pw"], params["bn_g1_pw"], eps)
    wd1, bd1 = _fold_bn(params["w_g1_dw"], params["bn_g1_dw"], eps)
    w2, b2 = _fold_bn(params["w_g2_pw"], params["bn_g2_pw"], eps)
    wd2, bd2 = _fold_bn(params["w_g2_dw"], params["bn_g2_dw"], eps)

    w1 = w1[:, :, 0, 0].astype(jnp.float32)                 # (cA, c1)
    w2 = w2[:, :, 0, 0].astype(jnp.float32)                 # (cB, 2*cA)
    w2a, w2b = w2[:, :cA], w2[:, cA:]
    wd1 = wd1.reshape(cA, 25).astype(jnp.float32)           # taps kh*5+kw
    wd2 = wd2.reshape(cB, 25).astype(jnp.float32)
    b1 = b1.reshape(cA, 1).astype(jnp.float32)
    bd1 = bd1.reshape(cA, 1).astype(jnp.float32)
    b2 = b2.reshape(cB, 1).astype(jnp.float32)
    bd2 = bd2.reshape(cB, 1).astype(jnp.float32)

    # Column-validity masks for the flattened H*W layout (one per kw offset).
    col = np.arange(HW) % W
    colmask = jnp.asarray(np.stack(
        [((col + d >= 0) & (col + d < W)).astype(np.float32) for d in range(-2, 3)],
        axis=0))                                            # (5, HW)

    x_flat = x.reshape(N, c1, HW)                           # contiguous, no transpose

    kernel = functools.partial(_ghost_bottleneck_kernel, H=H, W=W)

    flops = 2 * N * HW * (c1 * cA + 25 * cA + 2 * cA * cB + 25 * cB)
    cost = pl.CostEstimate(
        flops=int(flops),
        transcendentals=int(2 * N * cA * HW),
        bytes_accessed=int(4 * (x.size + N * c2 * HW)))

    # NOTE: for large feature maps (e.g. 112x112) tile the grid over
    # (N, row-blocks) with a +/-2 halo so the working set stays under v7x's
    # 64 MiB VMEM; whole-image blocks are fine at these sizes.
    out_flat = pl.pallas_call(
        kernel,
        out_shape=jax.ShapeDtypeStruct((N, c2, HW), x.dtype),
        grid_spec=pltpu.PrefetchScalarGridSpec(
            num_scalar_prefetch=0,
            grid=(N,),
            in_specs=[
                pl.BlockSpec((1, c1, HW), lambda n: (n, 0, 0)),
                pl.BlockSpec((cA, c1), lambda n: (0, 0)),
                pl.BlockSpec((cA, 1), lambda n: (0, 0)),
                pl.BlockSpec((cA, 25), lambda n: (0, 0)),
                pl.BlockSpec((cA, 1), lambda n: (0, 0)),
                pl.BlockSpec((cB, cA), lambda n: (0, 0)),
                pl.BlockSpec((cB, cA), lambda n: (0, 0)),
                pl.BlockSpec((cB, 1), lambda n: (0, 0)),
                pl.BlockSpec((cB, 25), lambda n: (0, 0)),
                pl.BlockSpec((cB, 1), lambda n: (0, 0)),
                pl.BlockSpec((5, HW), lambda n: (0, 0)),
            ],
            out_specs=pl.BlockSpec((1, c2, HW), lambda n: (n, 0, 0)),
            scratch_shapes=[
                pltpu.VMEM((cA, HW + 2 * PAD), jnp.float32),
                pltpu.VMEM((cB, HW + 2 * PAD), jnp.float32),
            ],
        ),
        compiler_params=pltpu.CompilerParams(
            dimension_semantics=("parallel",),
            vmem_limit_bytes=32 * 1024 * 1024,
        ),
        cost_estimate=cost,
    )(x_flat, w1, b1, wd1, bd1, w2a, w2b, b2, wd2, bd2, colmask)

    return out_flat.reshape(N, c2, H, W)


def reference_forward(x, params, eps=1e-5):
    """Pure-JAX mirror of the PyTorch eval-mode GhostBottleneck (s=1)."""
    def conv_bn(inp, w, bn, groups, act):
        gamma, beta, mean, var = bn
        k = w.shape[-1]
        p = k // 2
        dn = lax.conv_dimension_numbers(inp.shape, w.shape, ("NCHW", "OIHW", "NCHW"))
        y = lax.conv_general_dilated(
            inp, w, window_strides=(1, 1), padding=((p, p), (p, p)),
            dimension_numbers=dn, feature_group_count=groups,
            precision=lax.Precision.HIGHEST)
        s = gamma / jnp.sqrt(var + eps)
        y = y * s.reshape(1, -1, 1, 1) + (beta - mean * s).reshape(1, -1, 1, 1)
        return y * jax.nn.sigmoid(y) if act else y

    y1 = conv_bn(x, params["w_g1_pw"], params["bn_g1_pw"], 1, True)
    y2 = conv_bn(y1, params["w_g1_dw"], params["bn_g1_dw"], y1.shape[1], True)
    g1 = jnp.concatenate([y1, y2], axis=1)
    z1 = conv_bn(g1, params["w_g2_pw"], params["bn_g2_pw"], 1, False)
    z2 = conv_bn(z1, params["w_g2_dw"], params["bn_g2_dw"], z1.shape[1], False)
    return jnp.concatenate([z1, z2], axis=1) + x


if __name__ == "__main__":
    # GhostBottleneck(c1=8, c2=8, k=3, s=1): cA = 2, cB = 4, H = W = 16, N = 2.
    N, c1, H, W = 2, 8, 16, 16
    c2 = c1
    cA = (c2 // 2) // 2
    cB = c2 // 2

    key = jax.random.PRNGKey(0)
    ks = jax.random.split(key, 9)

    def bn_init(k, c):
        k1, k2, k3, k4 = jax.random.split(k, 4)
        return (1.0 + 0.1 * jax.random.normal(k1, (c,), jnp.float32),   # gamma
                0.1 * jax.random.normal(k2, (c,), jnp.float32),         # beta
                0.1 * jax.random.normal(k3, (c,), jnp.float32),         # running mean
                jax.random.uniform(k4, (c,), jnp.float32, 0.5, 1.5))    # running var

    params = {
        "w_g1_pw": 0.3 * jax.random.normal(ks[1], (cA, c1, 1, 1), jnp.float32),
        "bn_g1_pw": bn_init(ks[2], cA),
        "w_g1_dw": 0.2 * jax.random.normal(ks[3], (cA, 1, 5, 5), jnp.float32),
        "bn_g1_dw": bn_init(ks[4], cA),
        "w_g2_pw": 0.3 * jax.random.normal(ks[5], (cB, 2 * cA, 1, 1), jnp.float32),
        "bn_g2_pw": bn_init(ks[6], cB),
        "w_g2_dw": 0.2 * jax.random.normal(ks[7], (cB, 1, 5, 5), jnp.float32),
        "bn_g2_dw": bn_init(ks[8], cB),
    }
    x = jax.random.normal(ks[0], (N, c1, H, W), jnp.float32)

    out = ghost_bottleneck(x, params)
    out = jax.block_until_ready(out)

    ref = reference_forward(x, params)
    np.testing.assert_allclose(np.asarray(out), np.asarray(ref),
                               rtol=1e-3, atol=1e-3)
    print("KERNEL_OK")
</pallas_src>

<mosaic_0001>
module attributes {stable_mosaic.version = 11 : i64} {
  func.func @_ghost_bottleneck_kernel(%arg0: i32, %arg1: memref<1x8x256xf32, #tpu.memory_space<vmem>>, %arg2: memref<2x8xf32, #tpu.memory_space<vmem>>, %arg3: memref<2x1xf32, #tpu.memory_space<vmem>>, %arg4: memref<2x25xf32, #tpu.memory_space<vmem>>, %arg5: memref<2x1xf32, #tpu.memory_space<vmem>>, %arg6: memref<4x2xf32, #tpu.memory_space<vmem>>, %arg7: memref<4x2xf32, #tpu.memory_space<vmem>>, %arg8: memref<4x1xf32, #tpu.memory_space<vmem>>, %arg9: memref<4x25xf32, #tpu.memory_space<vmem>>, %arg10: memref<4x1xf32, #tpu.memory_space<vmem>>, %arg11: memref<5x256xf32, #tpu.memory_space<vmem>>, %arg12: memref<1x8x256xf32, #tpu.memory_space<vmem>>, %arg13: memref<2x324xf32, #tpu.memory_space<vmem>>, %arg14: memref<4x324xf32, #tpu.memory_space<vmem>>) attributes {dimension_semantics = [#tpu.dimension_semantics<parallel>], iteration_bounds = array<i64: 2>, scalar_prefetch = 0 : i64, scratch_operands = 2 : i64, tpu.core_type = #tpu.core_type<tc>, window_params = [{transform_indices = @transform_0, window_bounds = array<i64: 1, 8, 256>}, {pipeline_mode = #tpu.pipeline_mode<synchronous>, transform_indices = @transform_1, window_bounds = array<i64: 2, 8>}, {pipeline_mode = #tpu.pipeline_mode<synchronous>, transform_indices = @transform_2, window_bounds = array<i64: 2, 1>}, {pipeline_mode = #tpu.pipeline_mode<synchronous>, transform_indices = @transform_3, window_bounds = array<i64: 2, 25>}, {pipeline_mode = #tpu.pipeline_mode<synchronous>, transform_indices = @transform_4, window_bounds = array<i64: 2, 1>}, {pipeline_mode = #tpu.pipeline_mode<synchronous>, transform_indices = @transform_5, window_bounds = array<i64: 4, 2>}, {pipeline_mode = #tpu.pipeline_mode<synchronous>, transform_indices = @transform_6, window_bounds = array<i64: 4, 2>}, {pipeline_mode = #tpu.pipeline_mode<synchronous>, transform_indices = @transform_7, window_bounds = array<i64: 4, 1>}, {pipeline_mode = #tpu.pipeline_mode<synchronous>, transform_indices = @transform_8, window_bounds = array<i64: 4, 25>}, {pipeline_mode = #tpu.pipeline_mode<synchronous>, transform_indices = @transform_9, window_bounds = array<i64: 4, 1>}, {pipeline_mode = #tpu.pipeline_mode<synchronous>, transform_indices = @transform_10, window_bounds = array<i64: 5, 256>}, {transform_indices = @transform_11, window_bounds = array<i64: 1, 8, 256>}]} {
    %c0 = arith.constant 0 : index
    %c0_0 = arith.constant 0 : index
    %c0_1 = arith.constant 0 : index
    %0 = vector.load %arg1[%c0, %c0_0, %c0_1] : memref<1x8x256xf32, #tpu.memory_space<vmem>>, vector<1x8x256xf32>
    %1 = vector.shape_cast %0 : vector<1x8x256xf32> to vector<8x256xf32>
    %cst = arith.constant 0.000000e+00 : f32
    %2 = vector.broadcast %cst : f32 to vector<2x256xf32>
    %c0_2 = arith.constant 0 : index
    %c0_3 = arith.constant 0 : index
    %3 = vector.load %arg2[%c0_2, %c0_3] : memref<2x8xf32, #tpu.memory_space<vmem>>, vector<2x1xf32>
    %4 = vector.extract_strided_slice %1 {offsets = [0, 0], sizes = [1, 256], strides = [1, 1]} : vector<8x256xf32> to vector<1x256xf32>
    %5 = vector.broadcast %3 : vector<2x1xf32> to vector<2x256xf32>
    %6 = vector.broadcast %4 : vector<1x256xf32> to vector<2x256xf32>
    %7 = arith.mulf %5, %6 : vector<2x256xf32>
    %8 = arith.addf %2, %7 : vector<2x256xf32>
    %c0_4 = arith.constant 0 : index
    %c1 = arith.constant 1 : index
    %9 = vector.load %arg2[%c0_4, %c1] : memref<2x8xf32, #tpu.memory_space<vmem>>, vector<2x1xf32>
    %10 = vector.extract_strided_slice %1 {offsets = [1, 0], sizes = [1, 256], strides = [1, 1]} : vector<8x256xf32> to vector<1x256xf32>
    %11 = vector.broadcast %9 : vector<2x1xf32> to vector<2x256xf32>
    %12 = vector.broadcast %10 : vector<1x256xf32> to vector<2x256xf32>
    %13 = arith.mulf %11, %12 : vector<2x256xf32>
    %14 = arith.addf %8, %13 : vector<2x256xf32>
    %c0_5 = arith.constant 0 : index
    %c2 = arith.constant 2 : index
    %15 = vector.load %arg2[%c0_5, %c2] : memref<2x8xf32, #tpu.memory_space<vmem>>, vector<2x1xf32>
    %16 = vector.extract_strided_slice %1 {offsets = [2, 0], sizes = [1, 256], strides = [1, 1]} : vector<8x256xf32> to vector<1x256xf32>
    %17 = vector.broadcast %15 : vector<2x1xf32> to vector<2x256xf32>
    %18 = vector.broadcast %16 : vector<1x256xf32> to vector<2x256xf32>
    %19 = arith.mulf %17, %18 : vector<2x256xf32>
    %20 = arith.addf %14, %19 : vector<2x256xf32>
    %c0_6 = arith.constant 0 : index
    %c3 = arith.constant 3 : index
    %21 = vector.load %arg2[%c0_6, %c3] : memref<2x8xf32, #tpu.memory_space<vmem>>, vector<2x1xf32>
    %22 = vector.extract_strided_slice %1 {offsets = [3, 0], sizes = [1, 256], strides = [1, 1]} : vector<8x256xf32> to vector<1x256xf32>
    %23 = vector.broadcast %21 : vector<2x1xf32> to vector<2x256xf32>
    %24 = vector.broadcast %22 : vector<1x256xf32> to vector<2x256xf32>
    %25 = arith.mulf %23, %24 : vector<2x256xf32>
    %26 = arith.addf %20, %25 : vector<2x256xf32>
    %c0_7 = arith.constant 0 : index
    %c4 = arith.constant 4 : index
    %27 = vector.load %arg2[%c0_7, %c4] : memref<2x8xf32, #tpu.memory_space<vmem>>, vector<2x1xf32>
    %28 = vector.extract_strided_slice %1 {offsets = [4, 0], sizes = [1, 256], strides = [1, 1]} : vector<8x256xf32> to vector<1x256xf32>
    %29 = vector.broadcast %27 : vector<2x1xf32> to vector<2x256xf32>
    %30 = vector.broadcast %28 : vector<1x256xf32> to vector<2x256xf32>
    %31 = arith.mulf %29, %30 : vector<2x256xf32>
    %32 = arith.addf %26, %31 : vector<2x256xf32>
    %c0_8 = arith.constant 0 : index
    %c5 = arith.constant 5 : index
    %33 = vector.load %arg2[%c0_8, %c5] : memref<2x8xf32, #tpu.memory_space<vmem>>, vector<2x1xf32>
    %34 = vector.extract_strided_slice %1 {offsets = [5, 0], sizes = [1, 256], strides = [1, 1]} : vector<8x256xf32> to vector<1x256xf32>
    %35 = vector.broadcast %33 : vector<2x1xf32> to vector<2x256xf32>
    %36 = vector.broadcast %34 : vector<1x256xf32> to vector<2x256xf32>
    %37 = arith.mulf %35, %36 : vector<2x256xf32>
    %38 = arith.addf %32, %37 : vector<2x256xf32>
    %c0_9 = arith.constant 0 : index
    %c6 = arith.constant 6 : index
    %39 = vector.load %arg2[%c0_9, %c6] : memref<2x8xf32, #tpu.memory_space<vmem>>, vector<2x1xf32>
    %40 = vector.extract_strided_slice %1 {offsets = [6, 0], sizes = [1, 256], strides = [1, 1]} : vector<8x256xf32> to vector<1x256xf32>
    %41 = vector.broadcast %39 : vector<2x1xf32> to vector<2x256xf32>
    %42 = vector.broadcast %40 : vector<1x256xf32> to vector<2x256xf32>
    %43 = arith.mulf %41, %42 : vector<2x256xf32>
    %44 = arith.addf %38, %43 : vector<2x256xf32>
    %c0_10 = arith.constant 0 : index
    %c7 = arith.constant 7 : index
    %45 = vector.load %arg2[%c0_10, %c7] : memref<2x8xf32, #tpu.memory_space<vmem>>, vector<2x1xf32>
    %46 = vector.extract_strided_slice %1 {offsets = [7, 0], sizes = [1, 256], strides = [1, 1]} : vector<8x256xf32> to vector<1x256xf32>
    %47 = vector.broadcast %45 : vector<2x1xf32> to vector<2x256xf32>
    %48 = vector.broadcast %46 : vector<1x256xf32> to vector<2x256xf32>
    %49 = arith.mulf %47, %48 : vector<2x256xf32>
    %50 = arith.addf %44, %49 : vector<2x256xf32>
    %c0_11 = arith.constant 0 : index
    %c0_12 = arith.constant 0 : index
    %51 = vector.load %arg3[%c0_11, %c0_12] : memref<2x1xf32, #tpu.memory_space<vmem>>, vector<2x1xf32>
    %52 = vector.broadcast %51 : vector<2x1xf32> to vector<2x256xf32>
    %53 = arith.addf %50, %52 : vector<2x256xf32>
    %54 = arith.negf %53 : vector<2x256xf32>
    %55 = math.exp %54 : vector<2x256xf32>
    %cst_13 = arith.constant 1.000000e+00 : f32
    %56 = vector.broadcast %cst_13 : f32 to vector<2x256xf32>
    %57 = arith.addf %56, %55 : vector<2x256xf32>
    %58 = arith.divf %56, %57 : vector<2x256xf32>
    %59 = arith.mulf %53, %58 : vector<2x256xf32>
    %cst_14 = arith.constant 0.000000e+00 : f32
    %60 = vector.broadcast %cst_14 : f32 to vector<2x324xf32>
    %c0_15 = arith.constant 0 : index
    %c0_16 = arith.constant 0 : index
    %61 = vector.load %arg13[%c0_15, %c0_16] : memref<2x324xf32, #tpu.memory_space<vmem>>, vector<2x324xf32>
    tpu.vector_store %arg13[%c0_15, %c0_16], %60 {strides = array<i32>} : memref<2x324xf32, #tpu.memory_space<vmem>>, vector<2x324xf32>,
    %c0_17 = arith.constant 0 : index
    %c34 = arith.constant 34 : index
    %62 = vector.load %arg13[%c0_17, %c34] : memref<2x324xf32, #tpu.memory_space<vmem>>, vector<2x256xf32>
    tpu.vector_store %arg13[%c0_17, %c34], %59 {strides = array<i32>} : memref<2x324xf32, #tpu.memory_space<vmem>>, vector<2x256xf32>,
    %cst_18 = arith.constant 0.000000e+00 : f32
    %63 = vector.broadcast %cst_18 : f32 to vector<2x256xf32>
    %cst_19 = arith.constant 0.000000e+00 : f32
    %64 = vector.broadcast %cst_19 : f32 to vector<2x256xf32>
    %c0_20 = arith.constant 0 : index
    %c0_21 = arith.constant 0 : index
    %65 = vector.load %arg4[%c0_20, %c0_21] : memref<2x25xf32, #tpu.memory_space<vmem>>, vector<2x1xf32>
    %c0_22 = arith.constant 0 : index
    %c0_23 = arith.constant 0 : index
    %66 = vector.load %arg13[%c0_22, %c0_23] : memref<2x324xf32, #tpu.memory_space<vmem>>, vector<2x256xf32>
    %67 = vector.broadcast %65 : vector<2x1xf32> to vector<2x256xf32>
    %68 = arith.mulf %66, %67 : vector<2x256xf32>
    %69 = arith.addf %64, %68 : vector<2x256xf32>
    %c0_24 = arith.constant 0 : index
    %c5_25 = arith.constant 5 : index
    %70 = vector.load %arg4[%c0_24, %c5_25] : memref<2x25xf32, #tpu.memory_space<vmem>>, vector<2x1xf32>
    %c0_26 = arith.constant 0 : index
    %c16 = arith.constant 16 : index
    %71 = vector.load %arg13[%c0_26, %c16] : memref<2x324xf32, #tpu.memory_space<vmem>>, vector<2x256xf32>
    %72 = vector.broadcast %70 : vector<2x1xf32> to vector<2x256xf32>
    %73 = arith.mulf %71, %72 : vector<2x256xf32>
    %74 = arith.addf %69, %73 : vector<2x256xf32>
    %c0_27 = arith.constant 0 : index
    %c10 = arith.constant 10 : index
    %75 = vector.load %arg4[%c0_27, %c10] : memref<2x25xf32, #tpu.memory_space<vmem>>, vector<2x1xf32>
    %c0_28 = arith.constant 0 : index
    %c32 = arith.constant 32 : index
    %76 = vector.load %arg13[%c0_28, %c32] : memref<2x324xf32, #tpu.memory_space<vmem>>, vector<2x256xf32>
    %77 = vector.broadcast %75 : vector<2x1xf32> to vector<2x256xf32>
    %78 = arith.mulf %76, %77 : vector<2x256xf32>
    %79 = arith.addf %74, %78 : vector<2x256xf32>
    %c0_29 = arith.constant 0 : index
    %c15 = arith.constant 15 : index
    %80 = vector.load %arg4[%c0_29, %c15] : memref<2x25xf32, #tpu.memory_space<vmem>>, vector<2x1xf32>
    %c0_30 = arith.constant 0 : index
    %c48 = arith.constant 48 : index
    %81 = vector.load %arg13[%c0_30, %c48] : memref<2x324xf32, #tpu.memory_space<vmem>>, vector<2x256xf32>
    %82 = vector.broadcast %80 : vector<2x1xf32> to vector<2x256xf32>
    %83 = arith.mulf %81, %82 : vector<2x256xf32>
    %84 = arith.addf %79, %83 : vector<2x256xf32>
    %c0_31 = arith.constant 0 : index
    %c20 = arith.constant 20 : index
    %85 = vector.load %arg4[%c0_31, %c20] : memref<2x25xf32, #tpu.memory_space<vmem>>, vector<2x1xf32>
    %c0_32 = arith.constant 0 : index
    %c64 = arith.constant 64 : index
    %86 = vector.load %arg13[%c0_32, %c64] : memref<2x324xf32, #tpu.memory_space<vmem>>, vector<2x256xf32>
    %87 = vector.broadcast %85 : vector<2x1xf32> to vector<2x256xf32>
    %88 = arith.mulf %86, %87 : vector<2x256xf32>
    %89 = arith.addf %84, %88 : vector<2x256xf32>
    %c0_33 = arith.constant 0 : index
    %c0_34 = arith.constant 0 : index
    %90 = vector.load %arg11[%c0_33, %c0_34] : memref<5x256xf32, #tpu.memory_space<vmem>>, vector<1x256xf32>
    %91 = vector.broadcast %90 : vector<1x256xf32> to vector<2x256xf32>
    %92 = arith.mulf %89, %91 : vector<2x256xf32>
    %93 = arith.addf %63, %92 : vector<2x256xf32>
    %cst_35 = arith.constant 0.000000e+00 : f32
    %94 = vector.broadcast %cst_35 : f32 to vector<2x256xf32>
    %c0_36 = arith.constant 0 : index
    %c1_37 = arith.constant 1 : index
    %95 = vector.load %arg4[%c0_36, %c1_37] : memref<2x25xf32, #tpu.memory_space<vmem>>, vector<2x1xf32>
    %c0_38 = arith.constant 0 : index
    %c1_39 = arith.constant 1 : index
    %96 = vector.load %arg13[%c0_38, %c1_39] : memref<2x324xf32, #tpu.memory_space<vmem>>, vector<2x256xf32>
    %97 = vector.broadcast %95 : vector<2x1xf32> to vector<2x256xf32>
    %98 = arith.mulf %96, %97 : vector<2x256xf32>
    %99 = arith.addf %94, %98 : vector<2x256xf32>
    %c0_40 = arith.constant 0 : index
    %c6_41 = arith.constant 6 : index
    %100 = vector.load %arg4[%c0_40, %c6_41] : memref<2x25xf32, #tpu.memory_space<vmem>>, vector<2x1xf32>
    %c0_42 = arith.constant 0 : index
    %c17 = arith.constant 17 : index
    %101 = vector.load %arg13[%c0_42, %c17] : memref<2x324xf32, #tpu.memory_space<vmem>>, vector<2x256xf32>
    %102 = vector.broadcast %100 : vector<2x1xf32> to vector<2x256xf32>
    %103 = arith.mulf %101, %102 : vector<2x256xf32>
    %104 = arith.addf %99, %103 : vector<2x256xf32>
    %c0_43 = arith.constant 0 : index
    %c11 = arith.constant 11 : index
    %105 = vector.load %arg4[%c0_43, %c11] : memref<2x25xf32, #tpu.memory_space<vmem>>, vector<2x1xf32>
    %c0_44 = arith.constant 0 : index
    %c33 = arith.constant 33 : index
    %106 = vector.load %arg13[%c0_44, %c33] : memref<2x324xf32, #tpu.memory_space<vmem>>, vector<2x256xf32>
    %107 = vector.broadcast %105 : vector<2x1xf32> to vector<2x256xf32>
    %108 = arith.mulf %106, %107 : vector<2x256xf32>
    %109 = arith.addf %104, %108 : vector<2x256xf32>
    %c0_45 = arith.constant 0 : index
    %c16_46 = arith.constant 16 : index
    %110 = vector.load %arg4[%c0_45, %c16_46] : memref<2x25xf32, #tpu.memory_space<vmem>>, vector<2x1xf32>
    %c0_47 = arith.constant 0 : index
    %c49 = arith.constant 49 : index
    %111 = vector.load %arg13[%c0_47, %c49] : memref<2x324xf32, #tpu.memory_space<vmem>>, vector<2x256xf32>
    %112 = vector.broadcast %110 : vector<2x1xf32> to vector<2x256xf32>
    %113 = arith.mulf %111, %112 : vector<2x256xf32>
    %114 = arith.addf %109, %113 : vector<2x256xf32>
    %c0_48 = arith.constant 0 : index
    %c21 = arith.constant 21 : index
    %115 = vector.load %arg4[%c0_48, %c21] : memref<2x25xf32, #tpu.memory_space<vmem>>, vector<2x1xf32>
    %c0_49 = arith.constant 0 : index
    %c65 = arith.constant 65 : index
    %116 = vector.load %arg13[%c0_49, %c65] : memref<2x324xf32, #tpu.memory_space<vmem>>, vector<2x256xf32>
    %117 = vector.broadcast %115 : vector<2x1xf32> to vector<2x256xf32>
    %118 = arith.mulf %116, %117 : vector<2x256xf32>
    %119 = arith.addf %114, %118 : vector<2x256xf32>
    %c1_50 = arith.constant 1 : index
    %c0_51 = arith.constant 0 : index
    %120 = vector.load %arg11[%c1_50, %c0_51] : memref<5x256xf32, #tpu.memory_space<vmem>>, vector<1x256xf32>
    %121 = vector.broadcast %120 : vector<1x256xf32> to vector<2x256xf32>
    %122 = arith.mulf %119, %121 : vector<2x256xf32>
    %123 = arith.addf %93, %122 : vector<2x256xf32>
    %cst_52 = arith.constant 0.000000e+00 : f32
    %124 = vector.broadcast %cst_52 : f32 to vector<2x256xf32>
    %c0_53 = arith.constant 0 : index
    %c2_54 = arith.constant 2 : index
    %125 = vector.load %arg4[%c0_53, %c2_54] : memref<2x25xf32, #tpu.memory_space<vmem>>, vector<2x1xf32>
    %c0_55 = arith.constant 0 : index
    %c2_56 = arith.constant 2 : index
    %126 = vector.load %arg13[%c0_55, %c2_56] : memref<2x324xf32, #tpu.memory_space<vmem>>, vector<2x256xf32>
    %127 = vector.broadcast %125 : vector<2x1xf32> to vector<2x256xf32>
    %128 = arith.mulf %126, %127 : vector<2x256xf32>
    %129 = arith.addf %124, %128 : vector<2x256xf32>
    %c0_57 = arith.constant 0 : index
    %c7_58 = arith.constant 7 : index
    %130 = vector.load %arg4[%c0_57, %c7_58] : memref<2x25xf32, #tpu.memory_space<vmem>>, vector<2x1xf32>
    %c0_59 = arith.constant 0 : index
    %c18 = arith.constant 18 : index
    %131 = vector.load %arg13[%c0_59, %c18] : memref<2x324xf32, #tpu.memory_space<vmem>>, vector<2x256xf32>
    %132 = vector.broadcast %130 : vector<2x1xf32> to vector<2x256xf32>
    %133 = arith.mulf %131, %132 : vector<2x256xf32>
    %134 = arith.addf %129, %133 : vector<2x256xf32>
    %c0_60 = arith.constant 0 : index
    %c12 = arith.constant 12 : index
    %135 = vector.load %arg4[%c0_60, %c12] : memref<2x25xf32, #tpu.memory_space<vmem>>, vector<2x1xf32>
    %c0_61 = arith.constant 0 : index
    %c34_62 = arith.constant 34 : index
    %136 = vector.load %arg13[%c0_61, %c34_62] : memref<2x324xf32, #tpu.memory_space<vmem>>, vector<2x256xf32>
    %137 = vector.broadcast %135 : vector<2x1xf32> to vector<2x256xf32>
    %138 = arith.mulf %136, %137 : vector<2x256xf32>
    %139 = arith.addf %134, %138 : vector<2x256xf32>
    %c0_63 = arith.constant 0 : index
    %c17_64 = arith.constant 17 : index
    %140 = vector.load %arg4[%c0_63, %c17_64] : memref<2x25xf32, #tpu.memory_space<vmem>>, vector<2x1xf32>
    %c0_65 = arith.constant 0 : index
    %c50 = arith.constant 50 : index
    %141 = vector.load %arg13[%c0_65, %c50] : memref<2x324xf32, #tpu.memory_space<vmem>>, vector<2x256xf32>
    %142 = vector.broadcast %140 : vector<2x1xf32> to vector<2x256xf32>
    %143 = arith.mulf %141, %142 : vector<2x256xf32>
    %144 = arith.addf %139, %143 : vector<2x256xf32>
    %c0_66 = arith.constant 0 : index
    %c22 = arith.constant 22 : index
    %145 = vector.load %arg4[%c0_66, %c22] : memref<2x25xf32, #tpu.memory_space<vmem>>, vector<2x1xf32>
    %c0_67 = arith.constant 0 : index
    %c66 = arith.constant 66 : index
    %146 = vector.load %arg13[%c0_67, %c66] : memref<2x324xf32, #tpu.memory_space<vmem>>, vector<2x256xf32>
    %147 = vector.broadcast %145 : vector<2x1xf32> to vector<2x256xf32>
    %148 = arith.mulf %146, %147 : vector<2x256xf32>
    %149 = arith.addf %144, %148 : vector<2x256xf32>
    %150 = arith.addf %123, %149 : vector<2x256xf32>
    %cst_68 = arith.constant 0.000000e+00 : f32
    %151 = vector.broadcast %cst_68 : f32 to vector<2x256xf32>
    %c0_69 = arith.constant 0 : index
    %c3_70 = arith.constant 3 : index
    %152 = vector.load %arg4[%c0_69, %c3_70] : memref<2x25xf32, #tpu.memory_space<vmem>>, vector<2x1xf32>
    %c0_71 = arith.constant 0 : index
    %c3_72 = arith.constant 3 : index
    %153 = vector.load %arg13[%c0_71, %c3_72] : memref<2x324xf32, #tpu.memory_space<vmem>>, vector<2x256xf32>
    %154 = vector.broadcast %152 : vector<2x1xf32> to vector<2x256xf32>
    %155 = arith.mulf %153, %154 : vector<2x256xf32>
    %156 = arith.addf %151, %155 : vector<2x256xf32>
    %c0_73 = arith.constant 0 : index
    %c8 = arith.constant 8 : index
    %157 = vector.load %arg4[%c0_73, %c8] : memref<2x25xf32, #tpu.memory_space<vmem>>, vector<2x1xf32>
    %c0_74 = arith.constant 0 : index
    %c19 = arith.constant 19 : index
    %158 = vector.load %arg13[%c0_74, %c19] : memref<2x324xf32, #tpu.memory_space<vmem>>, vector<2x256xf32>
    %159 = vector.broadcast %157 : vector<2x1xf32> to vector<2x256xf32>
    %160 = arith.mulf %158, %159 : vector<2x256xf32>
    %161 = arith.addf %156, %160 : vector<2x256xf32>
    %c0_75 = arith.constant 0 : index
    %c13 = arith.constant 13 : index
    %162 = vector.load %arg4[%c0_75, %c13] : memref<2x25xf32, #tpu.memory_space<vmem>>, vector<2x1xf32>
    %c0_76 = arith.constant 0 : index
    %c35 = arith.constant 35 : index
    %163 = vector.load %arg13[%c0_76, %c35] : memref<2x324xf32, #tpu.memory_space<vmem>>, vector<2x256xf32>
    %164 = vector.broadcast %162 : vector<2x1xf32> to vector<2x256xf32>
    %165 = arith.mulf %163, %164 : vector<2x256xf32>
    %166 = arith.addf %161, %165 : vector<2x256xf32>
    %c0_77 = arith.constant 0 : index
    %c18_78 = arith.constant 18 : index
    %167 = vector.load %arg4[%c0_77, %c18_78] : memref<2x25xf32, #tpu.memory_space<vmem>>, vector<2x1xf32>
    %c0_79 = arith.constant 0 : index
    %c51 = arith.constant 51 : index
    %168 = vector.load %arg13[%c0_79, %c51] : memref<2x324xf32, #tpu.memory_space<vmem>>, vector<2x256xf32>
    %169 = vector.broadcast %167 : vector<2x1xf32> to vector<2x256xf32>
    %170 = arith.mulf %168, %169 : vector<2x256xf32>
    %171 = arith.addf %166, %170 : vector<2x256xf32>
    %c0_80 = arith.constant 0 : index
    %c23 = arith.constant 23 : index
    %172 = vector.load %arg4[%c0_80, %c23] : memref<2x25xf32, #tpu.memory_space<vmem>>, vector<2x1xf32>
    %c0_81 = arith.constant 0 : index
    %c67 = arith.constant 67 : index
    %173 = vector.load %arg13[%c0_81, %c67] : memref<2x324xf32, #tpu.memory_space<vmem>>, vector<2x256xf32>
    %174 = vector.broadcast %172 : vector<2x1xf32> to vector<2x256xf32>
    %175 = arith.mulf %173, %174 : vector<2x256xf32>
    %176 = arith.addf %171, %175 : vector<2x256xf32>
    %c3_82 = arith.constant 3 : index
    %c0_83 = arith.constant 0 : index
    %177 = vector.load %arg11[%c3_82, %c0_83] : memref<5x256xf32, #tpu.memory_space<vmem>>, vector<1x256xf32>
    %178 = vector.broadcast %177 : vector<1x256xf32> to vector<2x256xf32>
    %179 = arith.mulf %176, %178 : vector<2x256xf32>
    %180 = arith.addf %150, %179 : vector<2x256xf32>
    %cst_84 = arith.constant 0.000000e+00 : f32
    %181 = vector.broadcast %cst_84 : f32 to vector<2x256xf32>
    %c0_85 = arith.constant 0 : index
    %c4_86 = arith.constant 4 : index
    %182 = vector.load %arg4[%c0_85, %c4_86] : memref<2x25xf32, #tpu.memory_space<vmem>>, vector<2x1xf32>
    %c0_87 = arith.constant 0 : index
    %c4_88 = arith.constant 4 : index
    %183 = vector.load %arg13[%c0_87, %c4_88] : memref<2x324xf32, #tpu.memory_space<vmem>>, vector<2x256xf32>
    %184 = vector.broadcast %182 : vector<2x1xf32> to vector<2x256xf32>
    %185 = arith.mulf %183, %184 : vector<2x256xf32>
    %186 = arith.addf %181, %185 : vector<2x256xf32>
    %c0_89 = arith.constant 0 : index
    %c9 = arith.constant 9 : index
    %187 = vector.load %arg4[%c0_89, %c9] : memref<2x25xf32, #tpu.memory_space<vmem>>, vector<2x1xf32>
    %c0_90 = arith.constant 0 : index
    %c20_91 = arith.constant 20 : index
    %188 = vector.load %arg13[%c0_90, %c20_91] : memref<2x324xf32, #tpu.memory_space<vmem>>, vector<2x256xf32>
    %189 = vector.broadcast %187 : vector<2x1xf32> to vector<2x256xf32>
    %190 = arith.mulf %188, %189 : vector<2x256xf32>
    %191 = arith.addf %186, %190 : vector<2x256xf32>
    %c0_92 = arith.constant 0 : index
    %c14 = arith.constant 14 : index
    %192 = vector.load %arg4[%c0_92, %c14] : memref<2x25xf32, #tpu.memory_space<vmem>>, vector<2x1xf32>
    %c0_93 = arith.constant 0 : index
    %c36 = arith.constant 36 : index
    %193 = vector.load %arg13[%c0_93, %c36] : memref<2x324xf32, #tpu.memory_space<vmem>>, vector<2x256xf32>
    %194 = vector.broadcast %192 : vector<2x1xf32> to vector<2x256xf32>
    %195 = arith.mulf %193, %194 : vector<2x256xf32>
    %196 = arith.addf %191, %195 : vector<2x256xf32>
    %c0_94 = arith.constant 0 : index
    %c19_95 = arith.constant 19 : index
    %197 = vector.load %arg4[%c0_94, %c19_95] : memref<2x25xf32, #tpu.memory_space<vmem>>, vector<2x1xf32>
    %c0_96 = arith.constant 0 : index
    %c52 = arith.constant 52 : index
    %198 = vector.load %arg13[%c0_96, %c52] : memref<2x324xf32, #tpu.memory_space<vmem>>, vector<2x256xf32>
    %199 = vector.broadcast %197 : vector<2x1xf32> to vector<2x256xf32>
    %200 = arith.mulf %198, %199 : vector<2x256xf32>
    %201 = arith.addf %196, %200 : vector<2x256xf32>
    %c0_97 = arith.constant 0 : index
    %c24 = arith.constant 24 : index
    %202 = vector.load %arg4[%c0_97, %c24] : memref<2x25xf32, #tpu.memory_space<vmem>>, vector<2x1xf32>
    %c0_98 = arith.constant 0 : index
    %c68 = arith.constant 68 : index
    %203 = vector.load %arg13[%c0_98, %c68] : memref<2x324xf32, #tpu.memory_space<vmem>>, vector<2x256xf32>
    %204 = vector.broadcast %202 : vector<2x1xf32> to vector<2x256xf32>
    %205 = arith.mulf %203, %204 : vector<2x256xf32>
    %206 = arith.addf %201, %205 : vector<2x256xf32>
    %c4_99 = arith.constant 4 : index
    %c0_100 = arith.constant 0 : index
    %207 = vector.load %arg11[%c4_99, %c0_100] : memref<5x256xf32, #tpu.memory_space<vmem>>, vector<1x256xf32>
    %208 = vector.broadcast %207 : vector<1x256xf32> to vector<2x256xf32>
    %209 = arith.mulf %206, %208 : vector<2x256xf32>
    %210 = arith.addf %180, %209 : vector<2x256xf32>
    %c0_101 = arith.constant 0 : index
    %c0_102 = arith.constant 0 : index
    %211 = vector.load %arg5[%c0_101, %c0_102] : memref<2x1xf32, #tpu.memory_space<vmem>>, vector<2x1xf32>
    %212 = vector.broadcast %211 : vector<2x1xf32> to vector<2x256xf32>
    %213 = arith.addf %210, %212 : vector<2x256xf32>
    %214 = arith.negf %213 : vector<2x256xf32>
    %215 = math.exp %214 : vector<2x256xf32>
    %cst_103 = arith.constant 1.000000e+00 : f32
    %216 = vector.broadcast %cst_103 : f32 to vector<2x256xf32>
    %217 = arith.addf %216, %215 : vector<2x256xf32>
    %218 = arith.divf %216, %217 : vector<2x256xf32>
    %219 = arith.mulf %213, %218 : vector<2x256xf32>
    %cst_104 = arith.constant 0.000000e+00 : f32
    %220 = vector.broadcast %cst_104 : f32 to vector<4x256xf32>
    %c0_105 = arith.constant 0 : index
    %c0_106 = arith.constant 0 : index
    %221 = vector.load %arg6[%c0_105, %c0_106] : memref<4x2xf32, #tpu.memory_space<vmem>>, vector<4x1xf32>
    %222 = vector.extract_strided_slice %59 {offsets = [0, 0], sizes = [1, 256], strides = [1, 1]} : vector<2x256xf32> to vector<1x256xf32>
    %223 = vector.broadcast %221 : vector<4x1xf32> to vector<4x256xf32>
    %224 = vector.broadcast %222 : vector<1x256xf32> to vector<4x256xf32>
    %225 = arith.mulf %223, %224 : vector<4x256xf32>
    %226 = arith.addf %220, %225 : vector<4x256xf32>
    %c0_107 = arith.constant 0 : index
    %c1_108 = arith.constant 1 : index
    %227 = vector.load %arg6[%c0_107, %c1_108] : memref<4x2xf32, #tpu.memory_space<vmem>>, vector<4x1xf32>
    %228 = vector.extract_strided_slice %59 {offsets = [1, 0], sizes = [1, 256], strides = [1, 1]} : vector<2x256xf32> to vector<1x256xf32>
    %229 = vector.broadcast %227 : vector<4x1xf32> to vector<4x256xf32>
    %230 = vector.broadcast %228 : vector<1x256xf32> to vector<4x256xf32>
    %231 = arith.mulf %229, %230 : vector<4x256xf32>
    %232 = arith.addf %226, %231 : vector<4x256xf32>
    %cst_109 = arith.constant 0.000000e+00 : f32
    %233 = vector.broadcast %cst_109 : f32 to vector<4x256xf32>
    %c0_110 = arith.constant 0 : index
    %c0_111 = arith.constant 0 : index
    %234 = vector.load %arg7[%c0_110, %c0_111] : memref<4x2xf32, #tpu.memory_space<vmem>>, vector<4x1xf32>
    %235 = vector.extract_strided_slice %219 {offsets = [0, 0], sizes = [1, 256], strides = [1, 1]} : vector<2x256xf32> to vector<1x256xf32>
    %236 = vector.broadcast %234 : vector<4x1xf32> to vector<4x256xf32>
    %237 = vector.broadcast %235 : vector<1x256xf32> to vector<4x256xf32>
    %238 = arith.mulf %236, %237 : vector<4x256xf32>
    %239 = arith.addf %233, %238 : vector<4x256xf32>
    %c0_112 = arith.constant 0 : index
    %c1_113 = arith.constant 1 : index
    %240 = vector.load %arg7[%c0_112, %c1_113] : memref<4x2xf32, #tpu.memory_space<vmem>>, vector<4x1xf32>
    %241 = vector.extract_strided_slice %219 {offsets = [1, 0], sizes = [1, 256], strides = [1, 1]} : vector<2x256xf32> to vector<1x256xf32>
    %242 = vector.broadcast %240 : vector<4x1xf32> to vector<4x256xf32>
    %243 = vector.broadcast %241 : vector<1x256xf32> to vector<4x256xf32>
    %244 = arith.mulf %242, %243 : vector<4x256xf32>
    %245 = arith.addf %239, %244 : vector<4x256xf32>
    %246 = arith.addf %232, %245 : vector<4x256xf32>
    %c0_114 = arith.constant 0 : index
    %c0_115 = arith.constant 0 : index
    %247 = vector.load %arg8[%c0_114, %c0_115] : memref<4x1xf32, #tpu.memory_space<vmem>>, vector<4x1xf32>
    %248 = vector.broadcast %247 : vector<4x1xf32> to vector<4x256xf32>
    %249 = arith.addf %246, %248 : vector<4x256xf32>
    %cst_116 = arith.constant 0.000000e+00 : f32
    %250 = vector.broadcast %cst_116 : f32 to vector<4x324xf32>
    %c0_117 = arith.constant 0 : index
    %c0_118 = arith.constant 0 : index
    %251 = vector.load %arg14[%c0_117, %c0_118] : memref<4x324xf32, #tpu.memory_space<vmem>>, vector<4x324xf32>
    tpu.vector_store %arg14[%c0_117, %c0_118], %250 {strides = array<i32>} : memref<4x324xf32, #tpu.memory_space<vmem>>, vector<4x324xf32>,
    %c0_119 = arith.constant 0 : index
    %c34_120 = arith.constant 34 : index
    %252 = vector.load %arg14[%c0_119, %c34_120] : memref<4x324xf32, #tpu.memory_space<vmem>>, vector<4x256xf32>
    tpu.vector_store %arg14[%c0_119, %c34_120], %249 {strides = array<i32>} : memref<4x324xf32, #tpu.memory_space<vmem>>, vector<4x256xf32>,
    %cst_121 = arith.constant 0.000000e+00 : f32
    %253 = vector.broadcast %cst_121 : f32 to vector<4x256xf32>
    %cst_122 = arith.constant 0.000000e+00 : f32
    %254 = vector.broadcast %cst_122 : f32 to vector<4x256xf32>
    %c0_123 = arith.constant 0 : index
    %c0_124 = arith.constant 0 : index
    %255 = vector.load %arg9[%c0_123, %c0_124] : memref<4x25xf32, #tpu.memory_space<vmem>>, vector<4x1xf32>
    %c0_125 = arith.constant 0 : index
    %c0_126 = arith.constant 0 : index
    %256 = vector.load %arg14[%c0_125, %c0_126] : memref<4x324xf32, #tpu.memory_space<vmem>>, vector<4x256xf32>
    %257 = vector.broadcast %255 : vector<4x1xf32> to vector<4x256xf32>
    %258 = arith.mulf %256, %257 : vector<4x256xf32>
    %259 = arith.addf %254, %258 : vector<4x256xf32>
    %c0_127 = arith.constant 0 : index
    %c5_128 = arith.constant 5 : index
    %260 = vector.load %arg9[%c0_127, %c5_128] : memref<4x25xf32, #tpu.memory_space<vmem>>, vector<4x1xf32>
    %c0_129 = arith.constant 0 : index
    %c16_130 = arith.constant 16 : index
    %261 = vector.load %arg14[%c0_129, %c16_130] : memref<4x324xf32, #tpu.memory_space<vmem>>, vector<4x256xf32>
    %262 = vector.broadcast %260 : vector<4x1xf32> to vector<4x256xf32>
    %263 = arith.mulf %261, %262 : vector<4x256xf32>
    %264 = arith.addf %259, %263 : vector<4x256xf32>
    %c0_131 = arith.constant 0 : index
    %c10_132 = arith.constant 10 : index
    %265 = vector.load %arg9[%c0_131, %c10_132] : memref<4x25xf32, #tpu.memory_space<vmem>>, vector<4x1xf32>
    %c0_133 = arith.constant 0 : index
    %c32_134 = arith.constant 32 : index
    %266 = vector.load %arg14[%c0_133, %c32_134] : memref<4x324xf32, #tpu.memory_space<vmem>>, vector<4x256xf32>
    %267 = vector.broadcast %265 : vector<4x1xf32> to vector<4x256xf32>
    %268 = arith.mulf %266, %267 : vector<4x256xf32>
    %269 = arith.addf %264, %268 : vector<4x256xf32>
    %c0_135 = arith.constant 0 : index
    %c15_136 = arith.constant 15 : index
    %270 = vector.load %arg9[%c0_135, %c15_136] : memref<4x25xf32, #tpu.memory_space<vmem>>, vector<4x1xf32>
    %c0_137 = arith.constant 0 : index
    %c48_138 = arith.constant 48 : index
    %271 = vector.load %arg14[%c0_137, %c48_138] : memref<4x324xf32, #tpu.memory_space<vmem>>, vector<4x256xf32>
    %272 = vector.broadcast %270 : vector<4x1xf32> to vector<4x256xf32>
    %273 = arith.mulf %271, %272 : vector<4x256xf32>
    %274 = arith.addf %269, %273 : vector<4x256xf32>
    %c0_139 = arith.constant 0 : index
    %c20_140 = arith.constant 20 : index
    %275 = vector.load %arg9[%c0_139, %c20_140] : memref<4x25xf32, #tpu.memory_space<vmem>>, vector<4x1xf32>
    %c0_141 = arith.constant 0 : index
    %c64_142 = arith.constant 64 : index
    %276 = vector.load %arg14[%c0_141, %c64_142] : memref<4x324xf32, #tpu.memory_space<vmem>>, vector<4x256xf32>
    %277 = vector.broadcast %275 : vector<4x1xf32> to vector<4x256xf32>
    %278 = arith.mulf %276, %277 : vector<4x256xf32>
    %279 = arith.addf %274, %278 : vector<4x256xf32>
    %c0_143 = arith.constant 0 : index
    %c0_144 = arith.constant 0 : index
    %280 = vector.load %arg11[%c0_143, %c0_144] : memref<5x256xf32, #tpu.memory_space<vmem>>, vector<1x256xf32>
    %281 = vector.broadcast %280 : vector<1x256xf32> to vector<4x256xf32>
    %282 = arith.mulf %279, %281 : vector<4x256xf32>
    %283 = arith.addf %253, %282 : vector<4x256xf32>
    %cst_145 = arith.constant 0.000000e+00 : f32
    %284 = vector.broadcast %cst_145 : f32 to vector<4x256xf32>
    %c0_146 = arith.constant 0 : index
    %c1_147 = arith.constant 1 : index
    %285 = vector.load %arg9[%c0_146, %c1_147] : memref<4x25xf32, #tpu.memory_space<vmem>>, vector<4x1xf32>
    %c0_148 = arith.constant 0 : index
    %c1_149 = arith.constant 1 : index
    %286 = vector.load %arg14[%c0_148, %c1_149] : memref<4x324xf32, #tpu.memory_space<vmem>>, vector<4x256xf32>
    %287 = vector.broadcast %285 : vector<4x1xf32> to vector<4x256xf32>
    %288 = arith.mulf %286, %287 : vector<4x256xf32>
    %289 = arith.addf %284, %288 : vector<4x256xf32>
    %c0_150 = arith.constant 0 : index
    %c6_151 = arith.constant 6 : index
    %290 = vector.load %arg9[%c0_150, %c6_151] : memref<4x25xf32, #tpu.memory_space<vmem>>, vector<4x1xf32>
    %c0_152 = arith.constant 0 : index
    %c17_153 = arith.constant 17 : index
    %291 = vector.load %arg14[%c0_152, %c17_153] : memref<4x324xf32, #tpu.memory_space<vmem>>, vector<4x256xf32>
    %292 = vector.broadcast %290 : vector<4x1xf32> to vector<4x256xf32>
    %293 = arith.mulf %291, %292 : vector<4x256xf32>
    %294 = arith.addf %289, %293 : vector<4x256xf32>
    %c0_154 = arith.constant 0 : index
    %c11_155 = arith.constant 11 : index
    %295 = vector.load %arg9[%c0_154, %c11_155] : memref<4x25xf32, #tpu.memory_space<vmem>>, vector<4x1xf32>
    %c0_156 = arith.constant 0 : index
    %c33_157 = arith.constant 33 : index
    %296 = vector.load %arg14[%c0_156, %c33_157] : memref<4x324xf32, #tpu.memory_space<vmem>>, vector<4x256xf32>
    %297 = vector.broadcast %295 : vector<4x1xf32> to vector<4x256xf32>
    %298 = arith.mulf %296, %297 : vector<4x256xf32>
    %299 = arith.addf %294, %298 : vector<4x256xf32>
    %c0_158 = arith.constant 0 : index
    %c16_159 = arith.constant 16 : index
    %300 = vector.load %arg9[%c0_158, %c16_159] : memref<4x25xf32, #tpu.memory_space<vmem>>, vector<4x1xf32>
    %c0_160 = arith.constant 0 : index
    %c49_161 = arith.constant 49 : index
    %301 = vector.load %arg14[%c0_160, %c49_161] : memref<4x324xf32, #tpu.memory_space<vmem>>, vector<4x256xf32>
    %302 = vector.broadcast %300 : vector<4x1xf32> to vector<4x256xf32>
    %303 = arith.mulf %301, %302 : vector<4x256xf32>
    %304 = arith.addf %299, %303 : vector<4x256xf32>
    %c0_162 = arith.constant 0 : index
    %c21_163 = arith.constant 21 : index
    %305 = vector.load %arg9[%c0_162, %c21_163] : memref<4x25xf32, #tpu.memory_space<vmem>>, vector<4x1xf32>
    %c0_164 = arith.constant 0 : index
    %c65_165 = arith.constant 65 : index
    %306 = vector.load %arg14[%c0_164, %c65_165] : memref<4x324xf32, #tpu.memory_space<vmem>>, vector<4x256xf32>
    %307 = vector.broadcast %305 : vector<4x1xf32> to vector<4x256xf32>
    %308 = arith.mulf %306, %307 : vector<4x256xf32>
    %309 = arith.addf %304, %308 : vector<4x256xf32>
    %c1_166 = arith.constant 1 : index
    %c0_167 = arith.constant 0 : index
    %310 = vector.load %arg11[%c1_166, %c0_167] : memref<5x256xf32, #tpu.memory_space<vmem>>, vector<1x256xf32>
    %311 = vector.broadcast %310 : vector<1x256xf32> to vector<4x256xf32>
    %312 = arith.mulf %309, %311 : vector<4x256xf32>
    %313 = arith.addf %283, %312 : vector<4x256xf32>
    %cst_168 = arith.constant 0.000000e+00 : f32
    %314 = vector.broadcast %cst_168 : f32 to vector<4x256xf32>
    %c0_169 = arith.constant 0 : index
    %c2_170 = arith.constant 2 : index
    %315 = vector.load %arg9[%c0_169, %c2_170] : memref<4x25xf32, #tpu.memory_space<vmem>>, vector<4x1xf32>
    %c0_171 = arith.constant 0 : index
    %c2_172 = arith.constant 2 : index
    %316 = vector.load %arg14[%c0_171, %c2_172] : memref<4x324xf32, #tpu.memory_space<vmem>>, vector<4x256xf32>
    %317 = vector.broadcast %315 : vector<4x1xf32> to vector<4x256xf32>
    %318 = arith.mulf %316, %317 : vector<4x256xf32>
    %319 = arith.addf %314, %318 : vector<4x256xf32>
    %c0_173 = arith.constant 0 : index
    %c7_174 = arith.constant 7 : index
    %320 = vector.load %arg9[%c0_173, %c7_174] : memref<4x25xf32, #tpu.memory_space<vmem>>, vector<4x1xf32>
    %c0_175 = arith.constant 0 : index
    %c18_176 = arith.constant 18 : index
    %321 = vector.load %arg14[%c0_175, %c18_176] : memref<4x324xf32, #tpu.memory_space<vmem>>, vector<4x256xf32>
    %322 = vector.broadcast %320 : vector<4x1xf32> to vector<4x256xf32>
    %323 = arith.mulf %321, %322 : vector<4x256xf32>
    %324 = arith.addf %319, %323 : vector<4x256xf32>
    %c0_177 = arith.constant 0 : index
    %c12_178 = arith.constant 12 : index
    %325 = vector.load %arg9[%c0_177, %c12_178] : memref<4x25xf32, #tpu.memory_space<vmem>>, vector<4x1xf32>
    %c0_179 = arith.constant 0 : index
    %c34_180 = arith.constant 34 : index
    %326 = vector.load %arg14[%c0_179, %c34_180] : memref<4x324xf32, #tpu.memory_space<vmem>>, vector<4x256xf32>
    %327 = vector.broadcast %325 : vector<4x1xf32> to vector<4x256xf32>
    %328 = arith.mulf %326, %327 : vector<4x256xf32>
    %329 = arith.addf %324, %328 : vector<4x256xf32>
    %c0_181 = arith.constant 0 : index
    %c17_182 = arith.constant 17 : index
    %330 = vector.load %arg9[%c0_181, %c17_182] : memref<4x25xf32, #tpu.memory_space<vmem>>, vector<4x1xf32>
    %c0_183 = arith.constant 0 : index
    %c50_184 = arith.constant 50 : index
    %331 = vector.load %arg14[%c0_183, %c50_184] : memref<4x324xf32, #tpu.memory_space<vmem>>, vector<4x256xf32>
    %332 = vector.broadcast %330 : vector<4x1xf32> to vector<4x256xf32>
    %333 = arith.mulf %331, %332 : vector<4x256xf32>
    %334 = arith.addf %329, %333 : vector<4x256xf32>
    %c0_185 = arith.constant 0 : index
    %c22_186 = arith.constant 22 : index
    %335 = vector.load %arg9[%c0_185, %c22_186] : memref<4x25xf32, #tpu.memory_space<vmem>>, vector<4x1xf32>
    %c0_187 = arith.constant 0 : index
    %c66_188 = arith.constant 66 : index
    %336 = vector.load %arg14[%c0_187, %c66_188] : memref<4x324xf32, #tpu.memory_space<vmem>>, vector<4x256xf32>
    %337 = vector.broadcast %335 : vector<4x1xf32> to vector<4x256xf32>
    %338 = arith.mulf %336, %337 : vector<4x256xf32>
    %339 = arith.addf %334, %338 : vector<4x256xf32>
    %340 = arith.addf %313, %339 : vector<4x256xf32>
    %cst_189 = arith.constant 0.000000e+00 : f32
    %341 = vector.broadcast %cst_189 : f32 to vector<4x256xf32>
    %c0_190 = arith.constant 0 : index
    %c3_191 = arith.constant 3 : index
    %342 = vector.load %arg9[%c0_190, %c3_191] : memref<4x25xf32, #tpu.memory_space<vmem>>, vector<4x1xf32>
    %c0_192 = arith.constant 0 : index
    %c3_193 = arith.constant 3 : index
    %343 = vector.load %arg14[%c0_192, %c3_193] : memref<4x324xf32, #tpu.memory_space<vmem>>, vector<4x256xf32>
    %344 = vector.broadcast %342 : vector<4x1xf32> to vector<4x256xf32>
    %345 = arith.mulf %343, %344 : vector<4x256xf32>
    %346 = arith.addf %341, %345 : vector<4x256xf32>
    %c0_194 = arith.constant 0 : index
    %c8_195 = arith.constant 8 : index
    %347 = vector.load %arg9[%c0_194, %c8_195] : memref<4x25xf32, #tpu.memory_space<vmem>>, vector<4x1xf32>
    %c0_196 = arith.constant 0 : index
    %c19_197 = arith.constant 19 : index
    %348 = vector.load %arg14[%c0_196, %c19_197] : memref<4x324xf32, #tpu.memory_space<vmem>>, vector<4x256xf32>
    %349 = vector.broadcast %347 : vector<4x1xf32> to vector<4x256xf32>
    %350 = arith.mulf %348, %349 : vector<4x256xf32>
    %351 = arith.addf %346, %350 : vector<4x256xf32>
    %c0_198 = arith.constant 0 : index
    %c13_199 = arith.constant 13 : index
    %352 = vector.load %arg9[%c0_198, %c13_199] : memref<4x25xf32, #tpu.memory_space<vmem>>, vector<4x1xf32>
    %c0_200 = arith.constant 0 : index
    %c35_201 = arith.constant 35 : index
    %353 = vector.load %arg14[%c0_200, %c35_201] : memref<4x324xf32, #tpu.memory_space<vmem>>, vector<4x256xf32>
    %354 = vector.broadcast %352 : vector<4x1xf32> to vector<4x256xf32>
    %355 = arith.mulf %353, %354 : vector<4x256xf32>
    %356 = arith.addf %351, %355 : vector<4x256xf32>
    %c0_202 = arith.constant 0 : index
    %c18_203 = arith.constant 18 : index
    %357 = vector.load %arg9[%c0_202, %c18_203] : memref<4x25xf32, #tpu.memory_space<vmem>>, vector<4x1xf32>
    %c0_204 = arith.constant 0 : index
    %c51_205 = arith.constant 51 : index
    %358 = vector.load %arg14[%c0_204, %c51_205] : memref<4x324xf32, #tpu.memory_space<vmem>>, vector<4x256xf32>
    %359 = vector.broadcast %357 : vector<4x1xf32> to vector<4x256xf32>
    %360 = arith.mulf %358, %359 : vector<4x256xf32>
    %361 = arith.addf %356, %360 : vector<4x256xf32>
    %c0_206 = arith.constant 0 : index
    %c23_207 = arith.constant 23 : index
    %362 = vector.load %arg9[%c0_206, %c23_207] : memref<4x25xf32, #tpu.memory_space<vmem>>, vector<4x1xf32>
    %c0_208 = arith.constant 0 : index
    %c67_209 = arith.constant 67 : index
    %363 = vector.load %arg14[%c0_208, %c67_209] : memref<4x324xf32, #tpu.memory_space<vmem>>, vector<4x256xf32>
    %364 = vector.broadcast %362 : vector<4x1xf32> to vector<4x256xf32>
    %365 = arith.mulf %363, %364 : vector<4x256xf32>
    %366 = arith.addf %361, %365 : vector<4x256xf32>
    %c3_210 = arith.constant 3 : index
    %c0_211 = arith.constant 0 : index
    %367 = vector.load %arg11[%c3_210, %c0_211] : memref<5x256xf32, #tpu.memory_space<vmem>>, vector<1x256xf32>
    %368 = vector.broadcast %367 : vector<1x256xf32> to vector<4x256xf32>
    %369 = arith.mulf %366, %368 : vector<4x256xf32>
    %370 = arith.addf %340, %369 : vector<4x256xf32>
    %cst_212 = arith.constant 0.000000e+00 : f32
    %371 = vector.broadcast %cst_212 : f32 to vector<4x256xf32>
    %c0_213 = arith.constant 0 : index
    %c4_214 = arith.constant 4 : index
    %372 = vector.load %arg9[%c0_213, %c4_214] : memref<4x25xf32, #tpu.memory_space<vmem>>, vector<4x1xf32>
    %c0_215 = arith.constant 0 : index
    %c4_216 = arith.constant 4 : index
    %373 = vector.load %arg14[%c0_215, %c4_216] : memref<4x324xf32, #tpu.memory_space<vmem>>, vector<4x256xf32>
    %374 = vector.broadcast %372 : vector<4x1xf32> to vector<4x256xf32>
    %375 = arith.mulf %373, %374 : vector<4x256xf32>
    %376 = arith.addf %371, %375 : vector<4x256xf32>
    %c0_217 = arith.constant 0 : index
    %c9_218 = arith.constant 9 : index
    %377 = vector.load %arg9[%c0_217, %c9_218] : memref<4x25xf32, #tpu.memory_space<vmem>>, vector<4x1xf32>
    %c0_219 = arith.constant 0 : index
    %c20_220 = arith.constant 20 : index
    %378 = vector.load %arg14[%c0_219, %c20_220] : memref<4x324xf32, #tpu.memory_space<vmem>>, vector<4x256xf32>
    %379 = vector.broadcast %377 : vector<4x1xf32> to vector<4x256xf32>
    %380 = arith.mulf %378, %379 : vector<4x256xf32>
    %381 = arith.addf %376, %380 : vector<4x256xf32>
    %c0_221 = arith.constant 0 : index
    %c14_222 = arith.constant 14 : index
    %382 = vector.load %arg9[%c0_221, %c14_222] : memref<4x25xf32, #tpu.memory_space<vmem>>, vector<4x1xf32>
    %c0_223 = arith.constant 0 : index
    %c36_224 = arith.constant 36 : index
    %383 = vector.load %arg14[%c0_223, %c36_224] : memref<4x324xf32, #tpu.memory_space<vmem>>, vector<4x256xf32>
    %384 = vector.broadcast %382 : vector<4x1xf32> to vector<4x256xf32>
    %385 = arith.mulf %383, %384 : vector<4x256xf32>
    %386 = arith.addf %381, %385 : vector<4x256xf32>
    %c0_225 = arith.constant 0 : index
    %c19_226 = arith.constant 19 : index
    %387 = vector.load %arg9[%c0_225, %c19_226] : memref<4x25xf32, #tpu.memory_space<vmem>>, vector<4x1xf32>
    %c0_227 = arith.constant 0 : index
    %c52_228 = arith.constant 52 : index
    %388 = vector.load %arg14[%c0_227, %c52_228] : memref<4x324xf32, #tpu.memory_space<vmem>>, vector<4x256xf32>
    %389 = vector.broadcast %387 : vector<4x1xf32> to vector<4x256xf32>
    %390 = arith.mulf %388, %389 : vector<4x256xf32>
    %391 = arith.addf %386, %390 : vector<4x256xf32>
    %c0_229 = arith.constant 0 : index
    %c24_230 = arith.constant 24 : index
    %392 = vector.load %arg9[%c0_229, %c24_230] : memref<4x25xf32, #tpu.memory_space<vmem>>, vector<4x1xf32>
    %c0_231 = arith.constant 0 : index
    %c68_232 = arith.constant 68 : index
    %393 = vector.load %arg14[%c0_231, %c68_232] : memref<4x324xf32, #tpu.memory_space<vmem>>, vector<4x256xf32>
    %394 = vector.broadcast %392 : vector<4x1xf32> to vector<4x256xf32>
    %395 = arith.mulf %393, %394 : vector<4x256xf32>
    %396 = arith.addf %391, %395 : vector<4x256xf32>
    %c4_233 = arith.constant 4 : index
    %c0_234 = arith.constant 0 : index
    %397 = vector.load %arg11[%c4_233, %c0_234] : memref<5x256xf32, #tpu.memory_space<vmem>>, vector<1x256xf32>
    %398 = vector.broadcast %397 : vector<1x256xf32> to vector<4x256xf32>
    %399 = arith.mulf %396, %398 : vector<4x256xf32>
    %400 = arith.addf %370, %399 : vector<4x256xf32>
    %c0_235 = arith.constant 0 : index
    %c0_236 = arith.constant 0 : index
    %401 = vector.load %arg10[%c0_235, %c0_236] : memref<4x1xf32, #tpu.memory_space<vmem>>, vector<4x1xf32>
    %402 = vector.broadcast %401 : vector<4x1xf32> to vector<4x256xf32>
    %403 = arith.addf %400, %402 : vector<4x256xf32>
    %404 = vector.extract_strided_slice %1 {offsets = [0, 0], sizes = [4, 256], strides = [1, 1]} : vector<8x256xf32> to vector<4x256xf32>
    %405 = arith.addf %249, %404 : vector<4x256xf32>
    %406 = vector.shape_cast %405 : vector<4x256xf32> to vector<1x4x256xf32>
    %c0_237 = arith.constant 0 : index
    %c0_238 = arith.constant 0 : index
    %c0_239 = arith.constant 0 : index
    %407 = vector.load %arg12[%c0_237, %c0_238, %c0_239] : memref<1x8x256xf32, #tpu.memory_space<vmem>>, vector<1x4x256xf32>
    tpu.vector_store %arg12[%c0_237, %c0_238, %c0_239], %406 {strides = array<i32>} : memref<1x8x256xf32, #tpu.memory_space<vmem>>, vector<1x4x256xf32>,
    %408 = vector.extract_strided_slice %1 {offsets = [4, 0], sizes = [4, 256], strides = [1, 1]} : vector<8x256xf32> to vector<4x256xf32>
    %409 = arith.addf %403, %408 : vector<4x256xf32>
    %410 = vector.shape_cast %409 : vector<4x256xf32> to vector<1x4x256xf32>
    %c0_240 = arith.constant 0 : index
    %c4_241 = arith.constant 4 : index
    %c0_242 = arith.constant 0 : index
    %411 = vector.load %arg12[%c0_240, %c4_241, %c0_242] : memref<1x8x256xf32, #tpu.memory_space<vmem>>, vector<1x4x256xf32>
    tpu.vector_store %arg12[%c0_240, %c4_241, %c0_242], %410 {strides = array<i32>} : memref<1x8x256xf32, #tpu.memory_space<vmem>>, vector<1x4x256xf32>,
    return
  }
  func.func @transform_0(%arg0: i32) -> (i32, i32, i32) {
    %c0_i32 = arith.constant 0 : i32
    %c0_i32_0 = arith.constant 0 : i32
    %c0_i32_1 = arith.constant 0 : i32
    return %arg0, %c0_i32, %c0_i32_0 : i32, i32, i32
  }
  func.func @transform_1(%arg0: i32) -> (i32, i32) {
    %c0_i32 = arith.constant 0 : i32
    %c0_i32_0 = arith.constant 0 : i32
    %c0_i32_1 = arith.constant 0 : i32
    return %c0_i32, %c0_i32_0 : i32, i32
  }
  func.func @transform_2(%arg0: i32) -> (i32, i32) {
    %c0_i32 = arith.constant 0 : i32
    %c0_i32_0 = arith.constant 0 : i32
    %c0_i32_1 = arith.constant 0 : i32
    return %c0_i32, %c0_i32_0 : i32, i32
  }
  func.func @transform_3(%arg0: i32) -> (i32, i32) {
    %c0_i32 = arith.constant 0 : i32
    %c0_i32_0 = arith.constant 0 : i32
    %c0_i32_1 = arith.constant 0 : i32
    return %c0_i32, %c0_i32_0 : i32, i32
  }
  func.func @transform_4(%arg0: i32) -> (i32, i32) {
    %c0_i32 = arith.constant 0 : i32
    %c0_i32_0 = arith.constant 0 : i32
    %c0_i32_1 = arith.constant 0 : i32
    return %c0_i32, %c0_i32_0 : i32, i32
  }
  func.func @transform_5(%arg0: i32) -> (i32, i32) {
    %c0_i32 = arith.constant 0 : i32
    %c0_i32_0 = arith.constant 0 : i32
    %c0_i32_1 = arith.constant 0 : i32
    return %c0_i32, %c0_i32_0 : i32, i32
  }
  func.func @transform_6(%arg0: i32) -> (i32, i32) {
    %c0_i32 = arith.constant 0 : i32
    %c0_i32_0 = arith.constant 0 : i32
    %c0_i32_1 = arith.constant 0 : i32
    return %c0_i32, %c0_i32_0 : i32, i32
  }
  func.func @transform_7(%arg0: i32) -> (i32, i32) {
    %c0_i32 = arith.constant 0 : i32
    %c0_i32_0 = arith.constant 0 : i32
    %c0_i32_1 = arith.constant 0 : i32
    return %c0_i32, %c0_i32_0 : i32, i32
  }
  func.func @transform_8(%arg0: i32) -> (i32, i32) {
    %c0_i32 = arith.constant 0 : i32
    %c0_i32_0 = arith.constant 0 : i32
    %c0_i32_1 = arith.constant 0 : i32
    return %c0_i32, %c0_i32_0 : i32, i32
  }
  func.func @transform_9(%arg0: i32) -> (i32, i32) {
    %c0_i32 = arith.constant 0 : i32
    %c0_i32_0 = arith.constant 0 : i32
    %c0_i32_1 = arith.constant 0 : i32
    return %c0_i32, %c0_i32_0 : i32, i32
  }
  func.func @transform_10(%arg0: i32) -> (i32, i32) {
    %c0_i32 = arith.constant 0 : i32
    %c0_i32_0 = arith.constant 0 : i32
    %c0_i32_1 = arith.constant 0 : i32
    return %c0_i32, %c0_i32_0 : i32, i32
  }
  func.func @transform_11(%arg0: i32) -> (i32, i32, i32) {
    %c0_i32 = arith.constant 0 : i32
    %c0_i32_0 = arith.constant 0 : i32
    %c0_i32_1 = arith.constant 0 : i32
    return %arg0, %c0_i32, %c0_i32_0 : i32, i32, i32
  }
}

</mosaic_0001>

<llo_original>
// kernel: tpu_custom_call.1
$region0: #{tpu_custom_call.1}
  #allocation0 [shape = 'u32[]', space=smem, size = 0x4, offset = 0x4, fixed_abs, tag = 'smem constant byte address 0x4 - core index']
  #allocation1 [shape = 'u32[144,128]{1,0:T(1,128)}', space=vmem, size = 0x12000, scoped, tag = 'internal scratch']
  #allocation2 [shape = 'f32[2,324]{1,0:T(2,128)}', space=vmem, size = 0xc00, scoped, tag = 'scratch operand']
  #allocation3 [shape = 'f32[4,324]{1,0:T(4,128)}', space=vmem, size = 0x1800, scoped, tag = 'scratch operand']
  %s0 = inlined_call_operand.hbm [shape: f32[2,8,256], index: 0, kind: input, shape index: {}]
  %s1 = inlined_call_operand.vmem [shape: f32[2,8], index: 1, kind: input, shape index: {}]
  %s2 = inlined_call_operand.vmem [shape: f32[2,1], index: 2, kind: input, shape index: {}]
  %s3 = inlined_call_operand.vmem [shape: f32[2,25], index: 3, kind: input, shape index: {}]
  %s4 = inlined_call_operand.vmem [shape: f32[2,1], index: 4, kind: input, shape index: {}]
  %s5 = inlined_call_operand.vmem [shape: f32[4,2], index: 5, kind: input, shape index: {}]
  %s6 = inlined_call_operand.vmem [shape: f32[4,2], index: 6, kind: input, shape index: {}]
  %s7 = inlined_call_operand.vmem [shape: f32[4,1], index: 7, kind: input, shape index: {}]
  %s8 = inlined_call_operand.vmem [shape: f32[4,25], index: 8, kind: input, shape index: {}]
  %s9 = inlined_call_operand.vmem [shape: f32[4,1], index: 9, kind: input, shape index: {}]
  %s10 = inlined_call_operand.vmem [shape: f32[5,256], index: 10, kind: input, shape index: {}]
  %s11 = inlined_call_operand.hbm [shape: f32[2,8,256], index: 11, kind: output, shape index: {}]
  %s12 = sld [smem:[#allocation0]]
  $region81: #{tpu_custom_call.1} parent=0
    _
  %s14 = ssub.s32 1, %s12
  %s15 = scalar_select 0, %s14, %s12
  $region1: #{tpu_custom_call.1} parent=0
    #allocation4 [shape = 'u8[16384]{0}', space=vmem, size = 0x4000, scoped, tag = 'input window, operand 0']
    #allocation5 [shape = 's32[2]{0}', space=sflag, size = 0x8, scoped, tag = 'scoped memory for tpu_custom_call.1']
    #allocation6 [shape = 's32[2]{0}', space=sflag, size = 0x8, scoped, tag = 'scoped memory for tpu_custom_call.1']
    #allocation7 [shape = 'u8[16384]{0}', space=vmem, size = 0x4000, scoped, tag = 'output window, operand 0']
    %16 = vsyncpa [#allocation5], 0
    %s17 = scalar_lea.sflag [#allocation5], 1
    %18 = vsyncpa %s17, 0
    %19 = vsyncpa [#allocation6], 0
    %s20 = scalar_lea.sflag [#allocation6], 1
    %21 = vsyncpa %s20, 0
    loop: start=0, step=1, limit=4
    $region2: #{tpu_custom_call.1} parent=1 // loop_pre_header
      _
    $region3: #{tpu_custom_call.1} parent=1 // loop_header
      %s23 = sphi 0, %s27
      %p24 = scmp.ge.s32.totalorder %s23, 4
      %s33 = sphi 0, %s35
      %s36 = sphi 0, %s33
      %s37 = sphi 0, %s36
      %s53 = sphi 0, %s37
      %s57 = sphi 0, %s57
      %s59 = sphi 0, %s57
      %s60 = sphi 0, %s59
      %s74 = sphi 0, %s60
      %s78 = sphi 0, %s78
      %s80 = sphi 0, %s78
      %s81 = sphi 0, %s80
      %s95 = sphi 0, %s81
      %s99 = sphi 0, %s99
      %s101 = sphi 0, %s99
      %s102 = sphi 0, %s101
      %s116 = sphi 0, %s102
      %s120 = sphi 0, %s120
      %s122 = sphi 0, %s120
      %s123 = sphi 0, %s122
      %s137 = sphi 0, %s123
      %s141 = sphi 0, %s141
      %s143 = sphi 0, %s141
      %s144 = sphi 0, %s143
      %s158 = sphi 0, %s144
      %s162 = sphi 0, %s162
      %s164 = sphi 0, %s162
      %s165 = sphi 0, %s164
      %s179 = sphi 0, %s165
      %s183 = sphi 0, %s183
      %s185 = sphi 0, %s183
      %s186 = sphi 0, %s185
      %s200 = sphi 0, %s186
      %s204 = sphi 0, %s204
      %s206 = sphi 0, %s204
      %s207 = sphi 0, %s206
      %s221 = sphi 0, %s207
      %s225 = sphi 0, %s225
      %s227 = sphi 0, %s225
      %s228 = sphi 0, %s227
      %s242 = sphi 0, %s228
      %s246 = sphi 0, %s246
      %s248 = sphi 0, %s246
      %s249 = sphi 0, %s248
      %s263 = sphi 0, %s249
      %s269 = sphi 0, %s271
      %s272 = sphi 0, %s269
      %s273 = sphi 0, %s272
      %s289 = sphi 0, %s273
    $region4: #{tpu_custom_call.1} parent=1 // loop_header_branch
      %26 = sbr.rel (%p24) target = $region8
    $region5: #{tpu_custom_call.1} parent=1 // loop_body
      %s28 = ssub.s32 %s23, 1
      %s29 = ssub.s32 %s23, 2
      %s30 = sadd.s32 %s23, 1
      %s31 = ssub.s32 %s23, %s30
      %p32 = scmp.eq.s32.totalorder %s31, 0
      %s34 = sadd.s32 %s33, 1
      %s35 = scalar_select %p32, %s33, %s34
      %p38 = pneg %p32
      %p39 = scmp.eq.s32.totalorder %s23, 1
      %p40 = por %p38, %p39
      %p41 = scmp.ne.s32.totalorder %s33, %s36
      %p42 = scmp.eq.s32.totalorder %s23, 0
      %p43 = por %p41, %p42
      %p44 = scmp.ne.s32.totalorder %s33, %s36
      %p45 = scmp.eq.s32.totalorder %s28, 1
      %p46 = por %p44, %p45
      %p47 = scmp.ne.s32.totalorder %s36, %s37
      %p48 = scmp.eq.s32.totalorder %s28, 0
      %p49 = por %p47, %p48
      %p50 = scmp.ne.s32.totalorder %s36, %s37
      %p51 = scmp.eq.s32.totalorder %s29, 1
      %p52 = por %p50, %p51
      %p54 = scmp.ne.s32.totalorder %s37, %s53
      %p55 = scmp.eq.s32.totalorder %s29, 0
      %p56 = por %p54, %p55
      %s58 = sadd.s32 %s57, 1
      %p61 = scmp.eq.s32.totalorder %s23, 1
      %p62 = scmp.ne.s32.totalorder %s57, %s59
      %p63 = scmp.eq.s32.totalorder %s23, 0
      %p64 = por %p62, %p63
      %p65 = scmp.ne.s32.totalorder %s57, %s59
      %p66 = scmp.eq.s32.totalorder %s28, 1
      %p67 = por %p65, %p66
      %p68 = scmp.ne.s32.totalorder %s59, %s60
      %p69 = scmp.eq.s32.totalorder %s28, 0
      %p70 = por %p68, %p69
      %p71 = scmp.ne.s32.totalorder %s59, %s60
      %p72 = scmp.eq.s32.totalorder %s29, 1
      %p73 = por %p71, %p72
      %p75 = scmp.ne.s32.totalorder %s60, %s74
      %p76 = scmp.eq.s32.totalorder %s29, 0
      %p77 = por %p75, %p76
      %s79 = sadd.s32 %s78, 1
      %p82 = scmp.eq.s32.totalorder %s23, 1
      %p83 = scmp.ne.s32.totalorder %s78, %s80
      %p84 = scmp.eq.s32.totalorder %s23, 0
      %p85 = por %p83, %p84
      %p86 = scmp.ne.s32.totalorder %s78, %s80
      %p87 = scmp.eq.s32.totalorder %s28, 1
      %p88 = por %p86, %p87
      %p89 = scmp.ne.s32.totalorder %s80, %s81
      %p90 = scmp.eq.s32.totalorder %s28, 0
      %p91 = por %p89, %p90
      %p92 = scmp.ne.s32.totalorder %s80, %s81
      %p93 = scmp.eq.s32.totalorder %s29, 1
      %p94 = por %p92, %p93
      %p96 = scmp.ne.s32.totalorder %s81, %s95
      %p97 = scmp.eq.s32.totalorder %s29, 0
      %p98 = por %p96, %p97
      %s100 = sadd.s32 %s99, 1
      %p103 = scmp.eq.s32.totalorder %s23, 1
      %p104 = scmp.ne.s32.totalorder %s99, %s101
      %p105 = scmp.eq.s32.totalorder %s23, 0
      %p106 = por %p104, %p105
      %p107 = scmp.ne.s32.totalorder %s99, %s101
      %p108 = scmp.eq.s32.totalorder %s28, 1
      %p109 = por %p107, %p108
      %p110 = scmp.ne.s32.totalorder %s101, %s102
      %p111 = scmp.eq.s32.totalorder %s28, 0
      %p112 = por %p110, %p111
      %p113 = scmp.ne.s32.totalorder %s101, %s102
      %p114 = scmp.eq.s32.totalorder %s29, 1
      %p115 = por %p113, %p114
      %p117 = scmp.ne.s32.totalorder %s102, %s116
      %p118 = scmp.eq.s32.totalorder %s29, 0
      %p119 = por %p117, %p118
      %s121 = sadd.s32 %s120, 1
      %p124 = scmp.eq.s32.totalorder %s23, 1
      %p125 = scmp.ne.s32.totalorder %s120, %s122
      %p126 = scmp.eq.s32.totalorder %s23, 0
      %p127 = por %p125, %p126
      %p128 = scmp.ne.s32.totalorder %s120, %s122
      %p129 = scmp.eq.s32.totalorder %s28, 1
      %p130 = por %p128, %p129
      %p131 = scmp.ne.s32.totalorder %s122, %s123
      %p132 = scmp.eq.s32.totalorder %s28, 0
      %p133 = por %p131, %p132
      %p134 = scmp.ne.s32.totalorder %s122, %s123
      %p135 = scmp.eq.s32.totalorder %s29, 1
      %p136 = por %p134, %p135
      %p138 = scmp.ne.s32.totalorder %s123, %s137
      %p139 = scmp.eq.s32.totalorder %s29, 0
      %p140 = por %p138, %p139
      %s142 = sadd.s32 %s141, 1
      %p145 = scmp.eq.s32.totalorder %s23, 1
      %p146 = scmp.ne.s32.totalorder %s141, %s143
      %p147 = scmp.eq.s32.totalorder %s23, 0
      %p148 = por %p146, %p147
      %p149 = scmp.ne.s32.totalorder %s141, %s143
      %p150 = scmp.eq.s32.totalorder %s28, 1
      %p151 = por %p149, %p150
      %p152 = scmp.ne.s32.totalorder %s143, %s144
      %p153 = scmp.eq.s32.totalorder %s28, 0
      %p154 = por %p152, %p153
      %p155 = scmp.ne.s32.totalorder %s143, %s144
      %p156 = scmp.eq.s32.totalorder %s29, 1
      %p157 = por %p155, %p156
      %p159 = scmp.ne.s32.totalorder %s144, %s158
      %p160 = scmp.eq.s32.totalorder %s29, 0
      %p161 = por %p159, %p160
      %s163 = sadd.s32 %s162, 1
      %p166 = scmp.eq.s32.totalorder %s23, 1
      %p167 = scmp.ne.s32.totalorder %s162, %s164
      %p168 = scmp.eq.s32.totalorder %s23, 0
      %p169 = por %p167, %p168
      %p170 = scmp.ne.s32.totalorder %s162, %s164
      %p171 = scmp.eq.s32.totalorder %s28, 1
      %p172 = por %p170, %p171
      %p173 = scmp.ne.s32.totalorder %s164, %s165
      %p174 = scmp.eq.s32.totalorder %s28, 0
      %p175 = por %p173, %p174
      %p176 = scmp.ne.s32.totalorder %s164, %s165
      %p177 = scmp.eq.s32.totalorder %s29, 1
      %p178 = por %p176, %p177
      %p180 = scmp.ne.s32.totalorder %s165, %s179
      %p181 = scmp.eq.s32.totalorder %s29, 0
      %p182 = por %p180, %p181
      %s184 = sadd.s32 %s183, 1
      %p187 = scmp.eq.s32.totalorder %s23, 1
      %p188 = scmp.ne.s32.totalorder %s183, %s185
      %p189 = scmp.eq.s32.totalorder %s23, 0
      %p190 = por %p188, %p189
      %p191 = scmp.ne.s32.totalorder %s183, %s185
      %p192 = scmp.eq.s32.totalorder %s28, 1
      %p193 = por %p191, %p192
      %p194 = scmp.ne.s32.totalorder %s185, %s186
      %p195 = scmp.eq.s32.totalorder %s28, 0
      %p196 = por %p194, %p195
      %p197 = scmp.ne.s32.totalorder %s185, %s186
      %p198 = scmp.eq.s32.totalorder %s29, 1
      %p199 = por %p197, %p198
      %p201 = scmp.ne.s32.totalorder %s186, %s200
      %p202 = scmp.eq.s32.totalorder %s29, 0
      %p203 = por %p201, %p202
      %s205 = sadd.s32 %s204, 1
      %p208 = scmp.eq.s32.totalorder %s23, 1
      %p209 = scmp.ne.s32.totalorder %s204, %s206
      %p210 = scmp.eq.s32.totalorder %s23, 0
      %p211 = por %p209, %p210
      %p212 = scmp.ne.s32.totalorder %s204, %s206
      %p213 = scmp.eq.s32.totalorder %s28, 1
      %p214 = por %p212, %p213
      %p215 = scmp.ne.s32.totalorder %s206, %s207
      %p216 = scmp.eq.s32.totalorder %s28, 0
      %p217 = por %p215, %p216
      %p218 = scmp.ne.s32.totalorder %s206, %s207
      %p219 = scmp.eq.s32.totalorder %s29, 1
      %p220 = por %p218, %p219
      %p222 = scmp.ne.s32.totalorder %s207, %s221
      %p223 = scmp.eq.s32.totalorder %s29, 0
      %p224 = por %p222, %p223
      %s226 = sadd.s32 %s225, 1
      %p229 = scmp.eq.s32.totalorder %s23, 1
      %p230 = scmp.ne.s32.totalorder %s225, %s227
      %p231 = scmp.eq.s32.totalorder %s23, 0
      %p232 = por %p230, %p231
      %p233 = scmp.ne.s32.totalorder %s225, %s227
      %p234 = scmp.eq.s32.totalorder %s28, 1
      %p235 = por %p233, %p234
      %p236 = scmp.ne.s32.totalorder %s227, %s228
      %p237 = scmp.eq.s32.totalorder %s28, 0
      %p238 = por %p236, %p237
      %p239 = scmp.ne.s32.totalorder %s227, %s228
      %p240 = scmp.eq.s32.totalorder %s29, 1
      %p241 = por %p239, %p240
      %p243 = scmp.ne.s32.totalorder %s228, %s242
      %p244 = scmp.eq.s32.totalorder %s29, 0
      %p245 = por %p243, %p244
      %s247 = sadd.s32 %s246, 1
      %p250 = scmp.eq.s32.totalorder %s23, 1
      %p251 = scmp.ne.s32.totalorder %s246, %s248
      %p252 = scmp.eq.s32.totalorder %s23, 0
      %p253 = por %p251, %p252
      %p254 = scmp.ne.s32.totalorder %s246, %s248
      %p255 = scmp.eq.s32.totalorder %s28, 1
      %p256 = por %p254, %p255
      %p257 = scmp.ne.s32.totalorder %s248, %s249
      %p258 = scmp.eq.s32.totalorder %s28, 0
      %p259 = por %p257, %p258
      %p260 = scmp.ne.s32.totalorder %s248, %s249
      %p261 = scmp.eq.s32.totalorder %s29, 1
      %p262 = por %p260, %p261
      %p264 = scmp.ne.s32.totalorder %s249, %s263
      %p265 = scmp.eq.s32.totalorder %s29, 0
      %p266 = por %p264, %p265
      %s267 = ssub.s32 %s23, %s30
      %p268 = scmp.eq.s32.totalorder %s267, 0
      %s270 = sadd.s32 %s269, 1
      %s271 = scalar_select %p268, %s269, %s270
      %p274 = pneg %p268
      %p275 = scmp.eq.s32.totalorder %s23, 1
      %p276 = por %p274, %p275
      %p277 = scmp.ne.s32.totalorder %s269, %s272
      %p278 = scmp.eq.s32.totalorder %s23, 0
      %p279 = por %p277, %p278
      %p280 = scmp.ne.s32.totalorder %s269, %s272
      %p281 = scmp.eq.s32.totalorder %s28, 1
      %p282 = por %p280, %p281
      %p283 = scmp.ne.s32.totalorder %s272, %s273
      %p284 = scmp.eq.s32.totalorder %s28, 0
      %p285 = por %p283, %p284
      %p286 = scmp.ne.s32.totalorder %s272, %s273
      %p287 = scmp.eq.s32.totalorder %s29, 1
      %p288 = por %p286, %p287
      %p290 = scmp.ne.s32.totalorder %s273, %s289
      %p291 = scmp.eq.s32.totalorder %s29, 0
      %p292 = por %p290, %p291
      %p293 = scmp.le.s32.totalorder 1, %s23
      %p294 = scmp.lt.s32.totalorder %s23, 3
      %p295 = pnand %p293, %p294
      %p296 = pneg %p295
      // Predicated region
      $region9: #{tpu_custom_call.1} parent=5 // pred_check
        _
      $region10: #{tpu_custom_call.1} parent=5 // pred_check_branch
        %298 = sbr.rel (%p295) target = $region12
      $region11: #{tpu_custom_call.1} parent=5 // pred_region
        %s299 = ssub.s32 %s23, 1
        // Predicated region
        $region13: #{tpu_custom_call.1} parent=11 // pred_check
          %p300 = pneg %p70
        $region14: #{tpu_custom_call.1} parent=11 // pred_check_branch
          %302 = sbr.rel (%p300) target = $region16
        $region15: #{tpu_custom_call.1} parent=11 // pred_region
          _
        $region16: #{tpu_custom_call.1} parent=11 // pred_fallthru
          _
        // Predicated region
        $region17: #{tpu_custom_call.1} parent=11 // pred_check
          %p303 = pneg %p91
        $region18: #{tpu_custom_call.1} parent=11 // pred_check_branch
          %305 = sbr.rel (%p303) target = $region20
        $region19: #{tpu_custom_call.1} parent=11 // pred_region
          _
        $region20: #{tpu_custom_call.1} parent=11 // pred_fallthru
          _
        // Predicated region
        $region21: #{tpu_custom_call.1} parent=11 // pred_check
          %p306 = pneg %p112
        $region22: #{tpu_custom_call.1} parent=11 // pred_check_branch
          %308 = sbr.rel (%p306) target = $region24
        $region23: #{tpu_custom_call.1} parent=11 // pred_region
          _
        $region24: #{tpu_custom_call.1} parent=11 // pred_fallthru
          _
        // Predicated region
        $region25: #{tpu_custom_call.1} parent=11 // pred_check
          %p309 = pneg %p133
        $region26: #{tpu_custom_call.1} parent=11 // pred_check_branch
          %311 = sbr.rel (%p309) target = $region28
        $region27: #{tpu_custom_call.1} parent=11 // pred_region
          _
        $region28: #{tpu_custom_call.1} parent=11 // pred_fallthru
          _
        // Predicated region
        $region29: #{tpu_custom_call.1} parent=11 // pred_check
          %p312 = pneg %p154
        $region30: #{tpu_custom_call.1} parent=11 // pred_check_branch
          %314 = sbr.rel (%p312) target = $region32
        $region31: #{tpu_custom_call.1} parent=11 // pred_region
          _
        $region32: #{tpu_custom_call.1} parent=11 // pred_fallthru
          _
        // Predicated region
        $region33: #{tpu_custom_call.1} parent=11 // pred_check
          %p315 = pneg %p175
        $region34: #{tpu_custom_call.1} parent=11 // pred_check_branch
          %317 = sbr.rel (%p315) target = $region36
        $region35: #{tpu_custom_call.1} parent=11 // pred_region
          _
        $region36: #{tpu_custom_call.1} parent=11 // pred_fallthru
          _
        // Predicated region
        $region37: #{tpu_custom_call.1} parent=11 // pred_check
          %p318 = pneg %p196
        $region38: #{tpu_custom_call.1} parent=11 // pred_check_branch
          %320 = sbr.rel (%p318) target = $region40
        $region39: #{tpu_custom_call.1} parent=11 // pred_region
          _
        $region40: #{tpu_custom_call.1} parent=11 // pred_fallthru
          _
        // Predicated region
        $region41: #{tpu_custom_call.1} parent=11 // pred_check
          %p321 = pneg %p217
        $region42: #{tpu_custom_call.1} parent=11 // pred_check_branch
          %323 = sbr.rel (%p321) target = $region44
        $region43: #{tpu_custom_call.1} parent=11 // pred_region
          _
        $region44: #{tpu_custom_call.1} parent=11 // pred_fallthru
          _
        // Predicated region
        $region45: #{tpu_custom_call.1} parent=11 // pred_check
          %p324 = pneg %p238
        $region46: #{tpu_custom_call.1} parent=11 // pred_check_branch
          %326 = sbr.rel (%p324) target = $region48
        $region47: #{tpu_custom_call.1} parent=11 // pred_region
          _
        $region48: #{tpu_custom_call.1} parent=11 // pred_fallthru
          _
        // Predicated region
        $region49: #{tpu_custom_call.1} parent=11 // pred_check
          %p327 = pneg %p259
        $region50: #{tpu_custom_call.1} parent=11 // pred_check_branch
          %329 = sbr.rel (%p327) target = $region52
        $region51: #{tpu_custom_call.1} parent=11 // pred_region
          _
        $region52: #{tpu_custom_call.1} parent=11 // pred_fallthru
          _
      $region12: #{tpu_custom_call.1} parent=5 // pred_fallthru
        _
      %p330 = scmp.lt.s32.totalorder %s23, 2
      // Predicated region
      $region53: #{tpu_custom_call.1} parent=5 // pred_check
        %p331 = pneg %p330
      $region54: #{tpu_custom_call.1} parent=5 // pred_check_branch
        %333 = sbr.rel (%p331) target = $region56
      $region55: #{tpu_custom_call.1} parent=5 // pred_region
        // Predicated region
        $region57: #{tpu_custom_call.1} parent=55 // pred_check
          %p334 = pneg %p43
        $region58: #{tpu_custom_call.1} parent=55 // pred_check_branch
          %336 = sbr.rel (%p334) target = $region60
        $region59: #{tpu_custom_call.1} parent=55 // pred_region
          %s337 = sand.u32 %s33, 1
          %s338 = scalar_lea.sflag [#allocation5], %s337
          %s339 = sand.u32 %s33, 1
          %s340 = smul.addr %s339, 16
          %s341 = scalar_lea.vmem [#allocation4], %s340
          %s343 = ssub.s32 256, 256
          %344 = vsyncadd %s338, %s343
          %s345 = smul.addr %s23, 2
          %s346 = smul.addr %s345, 128
          %s347 = scalar_lea.hbm %s0, %s346
          %s349 = sshll.u32 %s341, 4
          %s350 = int_to_ptr.vmem [resolvable:$true] %s349
          %352 = dma.hbm_to_vmem [thread:$0]  %s347, 256, %s350, %s338
        $region60: #{tpu_custom_call.1} parent=55 // pred_fallthru
          _
      $region56: #{tpu_custom_call.1} parent=5 // pred_fallthru
        _
      %p353 = scmp.le.s32.totalorder 1, %s23
      %p354 = scmp.lt.s32.totalorder %s23, 3
      %p355 = pnand %p353, %p354
      %p356 = pneg %p355
      // Predicated region
      $region61: #{tpu_custom_call.1} parent=5 // pred_check
        _
      $region62: #{tpu_custom_call.1} parent=5 // pred_check_branch
        %358 = sbr.rel (%p355) target = $region64
      $region63: #{tpu_custom_call.1} parent=5 // pred_region
        %s359 = ssub.s32 %s23, 1
        %s360 = sand.u32 %s36, 1
        %s361 = scalar_lea.sflag [#allocation5], %s360
        %s362 = sand.u32 %s36, 1
        %s363 = smul.addr %s362, 16
        %s364 = scalar_lea.vmem [#allocation4], %s363
        // Predicated region
        $region65: #{tpu_custom_call.1} parent=63 // pred_check
          %p365 = pneg %p49
        $region66: #{tpu_custom_call.1} parent=63 // pred_check_branch
          %367 = sbr.rel (%p365) target = $region68
        $region67: #{tpu_custom_call.1} parent=63 // pred_region
          %368 = dma.done %s361, 256
        $region68: #{tpu_custom_call.1} parent=63 // pred_fallthru
          _
        %s369 = sand.u32 %s36, 1
        %s370 = scalar_lea.sflag [#allocation5], %s369
        %s371 = sand.u32 %s36, 1
        %s372 = smul.addr %s371, 16
        %s373 = scalar_lea.vmem [#allocation4], %s372
        %p374 = pneg %p49
        %p375 = pneg %p46
        %p376 = pneg %p70
        %p377 = pneg %p67
        %p378 = pneg %p91
        %p379 = pneg %p88
        %p380 = pneg %p112
        %p381 = pneg %p109
        %p382 = pneg %p133
        %p383 = pneg %p130
        %p384 = pneg %p154
        %p385 = pneg %p151
        %p386 = pneg %p175
        %p387 = pneg %p172
        %p388 = pneg %p196
        %p389 = pneg %p193
        %p390 = pneg %p217
        %p391 = pneg %p214
        %p392 = pneg %p238
        %p393 = pneg %p235
        %p394 = pneg %p259
        %p395 = pneg %p256
        %p396 = pneg %p285
        %p397 = pneg %p282
        %s398 = sand.u32 %s272, 1
        %s399 = scalar_lea.sflag [#allocation6], %s398
        %s400 = sand.u32 %s272, 1
        %s401 = smul.addr %s400, 16
        %s402 = scalar_lea.vmem [#allocation7], %s401
        %v403 = vld [vmem:[%s364] sm:$0xff]
        %v404 = vld [vmem:[%s364 + $0x8] sm:$0xff]
        %v405 = vld [vmem:[%s1] sm:$0x3]
        %407 = vset.pattern.permute.xlu0 0
        %408 = vperm.xlu0 %407, %v405
        %v409 = vpop.permute.xlu0 %408
        %v411 = vlaneseq
        %v412 = vshrl.u32 %v411, 7
        %v413 = vsub.s32 0, %v412
        %v414 = vrot.slane %v403, %v413
        %v415 = vlaneseq
        %v416 = vshrl.u32 %v415, 7
        %v417 = vsub.s32 0, %v416
        %v418 = vrot.slane %v404, %v417
        %v419 = vmul.f32 %v409, %v414
        %v420 = vmul.f32 %v409, %v418
        %v421 = vadd.f32 %v419, 0.0
        %v422 = vadd.f32 %v420, 0.0
        %423 = vset.pattern.permute.xlu0 1
        %424 = vperm.xlu0 %423, %v405
        %v425 = vpop.permute.xlu0 %424
        %v427 = vlaneseq
        %v428 = vshrl.u32 %v427, 7
        %v429 = vsub.s32 1, %v428
        %v430 = vrot.slane %v403, %v429
        %v431 = vlaneseq
        %v432 = vshrl.u32 %v431, 7
        %v433 = vsub.s32 1, %v432
        %v434 = vrot.slane %v404, %v433
        %v435 = vmul.f32 %v425, %v430
        %v436 = vmul.f32 %v425, %v434
        %v437 = vadd.f32 %v421, %v435
        %v438 = vadd.f32 %v422, %v436
        %439 = vset.pattern.permute.xlu0 2
        %440 = vperm.xlu0 %439, %v405
        %v441 = vpop.permute.xlu0 %440
        %v443 = vlaneseq
        %v444 = vshrl.u32 %v443, 7
        %v445 = vsub.s32 2, %v444
        %v446 = vrot.slane %v403, %v445
        %v447 = vlaneseq
        %v448 = vshrl.u32 %v447, 7
        %v449 = vsub.s32 2, %v448
        %v450 = vrot.slane %v404, %v449
        %v451 = vmul.f32 %v441, %v446
        %v452 = vmul.f32 %v441, %v450
        %v453 = vadd.f32 %v437, %v451
        %v454 = vadd.f32 %v438, %v452
        %455 = vset.pattern.permute.xlu0 3
        %456 = vperm.xlu0 %455, %v405
        %v457 = vpop.permute.xlu0 %456
        %v459 = vlaneseq
        %v460 = vshrl.u32 %v459, 7
        %v461 = vsub.s32 3, %v460
        %v462 = vrot.slane %v403, %v461
        %v463 = vlaneseq
        %v464 = vshrl.u32 %v463, 7
        %v465 = vsub.s32 3, %v464
        %v466 = vrot.slane %v404, %v465
        %v467 = vmul.f32 %v457, %v462
        %v468 = vmul.f32 %v457, %v466
        %v469 = vadd.f32 %v453, %v467
        %v470 = vadd.f32 %v454, %v468
        %471 = vset.pattern.permute.xlu0 4
        %472 = vperm.xlu0 %471, %v405
        %v473 = vpop.permute.xlu0 %472
        %v475 = vlaneseq
        %v476 = vshrl.u32 %v475, 7
        %v477 = vsub.s32 4, %v476
        %v478 = vrot.slane %v403, %v477
        %v479 = vlaneseq
        %v480 = vshrl.u32 %v479, 7
        %v481 = vsub.s32 4, %v480
        %v482 = vrot.slane %v404, %v481
        %v483 = vmul.f32 %v473, %v478
        %v484 = vmul.f32 %v473, %v482
        %v485 = vadd.f32 %v469, %v483
        %v486 = vadd.f32 %v470, %v484
        %487 = vset.pattern.permute.xlu0 5
        %488 = vperm.xlu0 %487, %v405
        %v489 = vpop.permute.xlu0 %488
        %v491 = vlaneseq
        %v492 = vshrl.u32 %v491, 7
        %v493 = vsub.s32 5, %v492
        %v494 = vrot.slane %v403, %v493
        %v495 = vlaneseq
        %v496 = vshrl.u32 %v495, 7
        %v497 = vsub.s32 5, %v496
        %v498 = vrot.slane %v404, %v497
        %v499 = vmul.f32 %v489, %v494
        %v500 = vmul.f32 %v489, %v498
        %v501 = vadd.f32 %v485, %v499
        %v502 = vadd.f32 %v486, %v500
        %503 = vset.pattern.permute.xlu0 6
        %504 = vperm.xlu0 %503, %v405
        %v505 = vpop.permute.xlu0 %504
        %v507 = vlaneseq
        %v508 = vshrl.u32 %v507, 7
        %v509 = vsub.s32 6, %v508
        %v510 = vrot.slane %v403, %v509
        %v511 = vlaneseq
        %v512 = vshrl.u32 %v511, 7
        %v513 = vsub.s32 6, %v512
        %v514 = vrot.slane %v404, %v513
        %v515 = vmul.f32 %v505, %v510
        %v516 = vmul.f32 %v505, %v514
        %v517 = vadd.f32 %v501, %v515
        %v518 = vadd.f32 %v502, %v516
        %519 = vset.pattern.permute.xlu0 7
        %520 = vperm.xlu0 %519, %v405
        %v521 = vpop.permute.xlu0 %520
        %v523 = vlaneseq
        %v524 = vshrl.u32 %v523, 7
        %v525 = vsub.s32 7, %v524
        %v526 = vrot.slane %v403, %v525
        %v527 = vlaneseq
        %v528 = vshrl.u32 %v527, 7
        %v529 = vsub.s32 7, %v528
        %v530 = vrot.slane %v404, %v529
        %v531 = vmul.f32 %v521, %v526
        %v532 = vmul.f32 %v521, %v530
        %v533 = vadd.f32 %v517, %v531
        %v534 = vadd.f32 %v518, %v532
        %v535 = vld [vmem:[%s2] sm:$0x3]
        %537 = vset.pattern.permute.xlu0 0
        %538 = vperm.xlu0 %537, %v535
        %v539 = vpop.permute.xlu0 %538
        %v541 = vadd.f32 %v533, %v539
        %v542 = vadd.f32 %v534, %v539
        %v543 = vxor.u32 %v541, 2147483648
        %v544 = vxor.u32 %v542, 2147483648
        %v545 = vmul.f32 %v543, 1.442695
        %v546 = vpow.pop %v545
        %v547 = vmul.f32 %v544, 1.442695
        %v548 = vpow.pop %v547
        %v549 = vadd.f32 %v546, 1.0
        %v550 = vadd.f32 %v548, 1.0
        %v551 = vrcp.pop %v549
        %v552 = vmul.f32 1.0, %v551
        %v553 = vrcp.pop %v550
        %v554 = vmul.f32 1.0, %v553
        %v555 = vmul.f32 %v541, %v552
        %v556 = vmul.f32 %v542, %v554
        %vm557 = vcmask 1041408
        %vm558 = vcmask 1043458
        %vm559 = vmor %vm558, %vm557
        %vm560 = vcmask 553988
        %vm561 = vmor %vm560, %vm559
        %562 = vst.msk [vmem:[#allocation2] sm:$0x3f] %vm561, 0.0
        %v565 = vcombine.low %v555, %v556
        %v567 = vunpack.c.l.s4 1983009808
        %v568 = vunpack.c.0.s8 %v567
        %v569 = vlaneseq
        %v570 = vshrl.u32 %v569, 7
        %v571 = vsub.s32 %v568, %v570
        %v572 = vrot.slane %v565, %v571
        %573 = vrot.lane.b32.xlu0 %v572, 34
        %v574 = vpop.permute.xlu0 %573
        %v575 = vrot.slane %v574, 6
        %vm576 = vcmask 277504
        %v577 = vsel %vm576, %v575, %v574
        %vm579 = vcmask 1041680
        %vm580 = vmor %vm558, %vm579
        %vm581 = vcmask 275460
        %vm582 = vmor %vm581, %vm580
        %583 = vst.msk [vmem:[#allocation2] sm:$0x3f] %vm582, %v577
        %v584 = vld [vmem:[%s3] sm:$0x3]
        %v585 = vld [vmem:[#allocation2] sm:$0xf]
        %587 = vset.pattern.permute.xlu0 0
        %588 = vperm.xlu0 %587, %v584
        %v589 = vpop.permute.xlu0 %588
        %v591 = vunpack.c.l.s4 269488144
        %v592 = vunpack.c.0.s8 %v591
        %v593 = vlaneseq
        %v594 = vshrl.u32 %v593, 7
        %v595 = vsub.s32 %v592, %v594
        %v596 = vrot.slane %v589, %v595
        %v598 = vmul.f32 %v585, %v596
        %v599 = vadd.f32 %v598, 0.0
        %v600 = vld [vmem:[#allocation2] sm:$0x3f]
        %601 = vset.pattern.permute.xlu0 5
        %602 = vperm.xlu0 %601, %v584
        %v603 = vpop.permute.xlu0 %602
        %v605 = vunpack.c.l.s4 269488144
        %v606 = vunpack.c.0.s8 %v605
        %v607 = vlaneseq
        %v608 = vshrl.u32 %v607, 7
        %v609 = vsub.s32 %v606, %v608
        %v610 = vrot.slane %v603, %v609
        %v612 = vmul.f32 %v600, %v610
        %614 = vrot.lane.b32.xlu0 %v612, 112
        %v615 = vpop.permute.xlu0 %614
        %v616 = vrot.slane %v615, 2
        %vm617 = vcmask 916480
        %v618 = vsel %vm617, %v615, %v616
        %v620 = vadd.f32 %v599, %v618
        %621 = vset.pattern.permute.xlu0 10
        %622 = vperm.xlu0 %621, %v584
        %v623 = vpop.permute.xlu0 %622
        %v625 = vunpack.c.l.s4 269488144
        %v626 = vunpack.c.0.s8 %v625
        %v627 = vlaneseq
        %v628 = vshrl.u32 %v627, 7
        %v629 = vsub.s32 %v626, %v628
        %v630 = vrot.slane %v623, %v629
        %v632 = vmul.f32 %v600, %v630
        %634 = vrot.lane.b32.xlu0 %v632, 96
        %v635 = vpop.permute.xlu0 %634
        %v636 = vrot.slane %v635, 2
        %vm637 = vcmask 785408
        %v638 = vsel %vm637, %v635, %v636
        %v640 = vadd.f32 %v620, %v638
        %641 = vset.pattern.permute.xlu0 15
        %642 = vperm.xlu0 %641, %v584
        %v643 = vpop.permute.xlu0 %642
        %v645 = vunpack.c.l.s4 269488144
        %v646 = vunpack.c.0.s8 %v645
        %v647 = vlaneseq
        %v648 = vshrl.u32 %v647, 7
        %v649 = vsub.s32 %v646, %v648
        %v650 = vrot.slane %v643, %v649
        %v652 = vmul.f32 %v600, %v650
        %654 = vrot.lane.b32.xlu0 %v652, 80
        %v655 = vpop.permute.xlu0 %654
        %v656 = vrot.slane %v655, 2
        %vm657 = vcmask 654336
        %v658 = vsel %vm657, %v655, %v656
        %v660 = vadd.f32 %v640, %v658
        %661 = vset.pattern.permute.xlu0 20
        %662 = vperm.xlu0 %661, %v584
        %v663 = vpop.permute.xlu0 %662
        %v665 = vunpack.c.l.s4 269488144
        %v666 = vunpack.c.0.s8 %v665
        %v667 = vlaneseq
        %v668 = vshrl.u32 %v667, 7
        %v669 = vsub.s32 %v666, %v668
        %v670 = vrot.slane %v663, %v669
        %v672 = vmul.f32 %v600, %v670
        %674 = vrot.lane.b32.xlu0 %v672, 64
        %v675 = vpop.permute.xlu0 %674
        %v676 = vrot.slane %v675, 2
        %vm677 = vcmask 523264
        %v678 = vsel %vm677, %v675, %v676
        %v680 = vadd.f32 %v660, %v678
        %v681 = vld [vmem:[%s10] ss:$8 sm:$0x3]
        %v683 = vlaneseq
        %v684 = vshrl.u32 %v683, 7
        %v685 = vsub.s32 0, %v684
        %v686 = vrot.slane %v681, %v685
        %v687 = vlaneseq
        %v688 = vshrl.u32 %v687, 7
        %v689 = vsub.s32 1, %v688
        %v690 = vrot.slane %v681, %v689
        %v691 = vcombine.low %v686, %v690
        %v693 = vunpack.c.l.s4 1983009808
        %v694 = vunpack.c.0.s8 %v693
        %v695 = vlaneseq
        %v696 = vshrl.u32 %v695, 7
        %v697 = vsub.s32 %v694, %v696
        %v698 = vrot.slane %v691, %v697
        %v700 = vmul.f32 %v680, %v698
        %v701 = vadd.f32 %v700, 0.0
        %v702 = vld [vmem:[%s3] sm:$0x3]
        %v703 = vld [vmem:[#allocation2] sm:$0x3f]
        %705 = vset.pattern.permute.xlu0 1
        %706 = vperm.xlu0 %705, %v702
        %v707 = vpop.permute.xlu0 %706
        %v709 = vunpack.c.l.s4 269488144
        %v710 = vunpack.c.0.s8 %v709
        %v711 = vlaneseq
        %v712 = vshrl.u32 %v711, 7
        %v713 = vsub.s32 %v710, %v712
        %v714 = vrot.slane %v707, %v713
        %v716 = vmul.f32 %v703, %v714
        %v717 = vadd.f32 %v716, 0.0
        %718 = vset.pattern.permute.xlu0 6
        %719 = vperm.xlu0 %718, %v702
        %v720 = vpop.permute.xlu0 %719
        %v722 = vunpack.c.l.s4 269488144
        %v723 = vunpack.c.0.s8 %v722
        %v724 = vlaneseq
        %v725 = vshrl.u32 %v724, 7
        %v726 = vsub.s32 %v723, %v725
        %v727 = vrot.slane %v720, %v726
        %v729 = vmul.f32 %v703, %v727
        %731 = vrot.lane.b32.xlu0 %v729, 112
        %v732 = vpop.permute.xlu0 %731
        %v733 = vrot.slane %v732, 2
        %v734 = vsel %vm617, %v732, %v733
        %v736 = vadd.f32 %v717, %v734
        %737 = vset.pattern.permute.xlu0 11
        %738 = vperm.xlu0 %737, %v702
        %v739 = vpop.permute.xlu0 %738
        %v741 = vunpack.c.l.s4 269488144
        %v742 = vunpack.c.0.s8 %v741
        %v743 = vlaneseq
        %v744 = vshrl.u32 %v743, 7
        %v745 = vsub.s32 %v742, %v744
        %v746 = vrot.slane %v739, %v745
        %v748 = vmul.f32 %v703, %v746
        %750 = vrot.lane.b32.xlu0 %v748, 96
        %v751 = vpop.permute.xlu0 %750
        %v752 = vrot.slane %v751, 2
        %v753 = vsel %vm637, %v751, %v752
        %v755 = vadd.f32 %v736, %v753
        %756 = vset.pattern.permute.xlu0 16
        %757 = vperm.xlu0 %756, %v702
        %v758 = vpop.permute.xlu0 %757
        %v760 = vunpack.c.l.s4 269488144
        %v761 = vunpack.c.0.s8 %v760
        %v762 = vlaneseq
        %v763 = vshrl.u32 %v762, 7
        %v764 = vsub.s32 %v761, %v763
        %v765 = vrot.slane %v758, %v764
        %v767 = vmul.f32 %v703, %v765
        %769 = vrot.lane.b32.xlu0 %v767, 80
        %v770 = vpop.permute.xlu0 %769
        %v771 = vrot.slane %v770, 2
        %v772 = vsel %vm657, %v770, %v771
        %v774 = vadd.f32 %v755, %v772
        %775 = vset.pattern.permute.xlu0 21
        %776 = vperm.xlu0 %775, %v702
        %v777 = vpop.permute.xlu0 %776
        %v779 = vunpack.c.l.s4 269488144
        %v780 = vunpack.c.0.s8 %v779
        %v781 = vlaneseq
        %v782 = vshrl.u32 %v781, 7
        %v783 = vsub.s32 %v780, %v782
        %v784 = vrot.slane %v777, %v783
        %v786 = vmul.f32 %v703, %v784
        %788 = vrot.lane.b32.xlu0 %v786, 64
        %v789 = vpop.permute.xlu0 %788
        %v790 = vrot.slane %v789, 2
        %v791 = vsel %vm677, %v789, %v790
        %v793 = vadd.f32 %v774, %v791
        %s794 = scalar_lea.vmem %s10, 1
        %v795 = vld [vmem:[%s794] ss:$8 sm:$0x3]
        %v797 = vlaneseq
        %v798 = vshrl.u32 %v797, 7
        %v799 = vsub.s32 0, %v798
        %v800 = vrot.slane %v795, %v799
        %v801 = vlaneseq
        %v802 = vshrl.u32 %v801, 7
        %v803 = vsub.s32 1, %v802
        %v804 = vrot.slane %v795, %v803
        %v805 = vcombine.low %v800, %v804
        %v807 = vunpack.c.l.s4 1983009808
        %v808 = vunpack.c.0.s8 %v807
        %v809 = vlaneseq
        %v810 = vshrl.u32 %v809, 7
        %v811 = vsub.s32 %v808, %v810
        %v812 = vrot.slane %v805, %v811
        %813 = vrot.lane.b32.xlu0 %v812, 1
        %v814 = vpop.permute.xlu0 %813
        %v815 = vrot.slane %v814, 6
        %vm816 = vcmask 7168
        %v817 = vsel %vm816, %v815, %v814
        %v819 = vmul.f32 %v793, %v817
        %821 = vrot.lane.b32.xlu0 %v819, 127
        %v822 = vpop.permute.xlu0 %821
        %v823 = vrot.slane %v822, 2
        %vm824 = vcmask 1039360
        %v825 = vsel %vm824, %v822, %v823
        %v827 = vadd.f32 %v701, %v825
        %v828 = vld [vmem:[%s3] sm:$0x3]
        %v829 = vld [vmem:[#allocation2] sm:$0x3f]
        %831 = vset.pattern.permute.xlu0 2
        %832 = vperm.xlu0 %831, %v828
        %v833 = vpop.permute.xlu0 %832
        %v835 = vunpack.c.l.s4 269488144
        %v836 = vunpack.c.0.s8 %v835
        %v837 = vlaneseq
        %v838 = vshrl.u32 %v837, 7
        %v839 = vsub.s32 %v836, %v838
        %v840 = vrot.slane %v833, %v839
        %v842 = vmul.f32 %v829, %v840
        %v843 = vadd.f32 %v842, 0.0
        %844 = vset.pattern.permute.xlu0 7
        %845 = vperm.xlu0 %844, %v828
        %v846 = vpop.permute.xlu0 %845
        %v848 = vunpack.c.l.s4 269488144
        %v849 = vunpack.c.0.s8 %v848
        %v850 = vlaneseq
        %v851 = vshrl.u32 %v850, 7
        %v852 = vsub.s32 %v849, %v851
        %v853 = vrot.slane %v846, %v852
        %v855 = vmul.f32 %v829, %v853
        %857 = vrot.lane.b32.xlu0 %v855, 112
        %v858 = vpop.permute.xlu0 %857
        %v859 = vrot.slane %v858, 2
        %v860 = vsel %vm617, %v858, %v859
        %v862 = vadd.f32 %v843, %v860
        %863 = vset.pattern.permute.xlu0 12
        %864 = vperm.xlu0 %863, %v828
        %v865 = vpop.permute.xlu0 %864
        %v867 = vunpack.c.l.s4 269488144
        %v868 = vunpack.c.0.s8 %v867
        %v869 = vlaneseq
        %v870 = vshrl.u32 %v869, 7
        %v871 = vsub.s32 %v868, %v870
        %v872 = vrot.slane %v865, %v871
        %v874 = vmul.f32 %v829, %v872
        %876 = vrot.lane.b32.xlu0 %v874, 96
        %v877 = vpop.permute.xlu0 %876
        %v878 = vrot.slane %v877, 2
        %v879 = vsel %vm637, %v877, %v878
        %v881 = vadd.f32 %v862, %v879
        %882 = vset.pattern.permute.xlu0 17
        %883 = vperm.xlu0 %882, %v828
        %v884 = vpop.permute.xlu0 %883
        %v886 = vunpack.c.l.s4 269488144
        %v887 = vunpack.c.0.s8 %v886
        %v888 = vlaneseq
        %v889 = vshrl.u32 %v888, 7
        %v890 = vsub.s32 %v887, %v889
        %v891 = vrot.slane %v884, %v890
        %v893 = vmul.f32 %v829, %v891
        %895 = vrot.lane.b32.xlu0 %v893, 80
        %v896 = vpop.permute.xlu0 %895
        %v897 = vrot.slane %v896, 2
        %v898 = vsel %vm657, %v896, %v897
        %v900 = vadd.f32 %v881, %v898
        %901 = vset.pattern.permute.xlu0 22
        %902 = vperm.xlu0 %901, %v828
        %v903 = vpop.permute.xlu0 %902
        %v905 = vunpack.c.l.s4 269488144
        %v906 = vunpack.c.0.s8 %v905
        %v907 = vlaneseq
        %v908 = vshrl.u32 %v907, 7
        %v909 = vsub.s32 %v906, %v908
        %v910 = vrot.slane %v903, %v909
        %v912 = vmul.f32 %v829, %v910
        %914 = vrot.lane.b32.xlu0 %v912, 64
        %v915 = vpop.permute.xlu0 %914
        %v916 = vrot.slane %v915, 2
        %v917 = vsel %vm677, %v915, %v916
        %v919 = vadd.f32 %v900, %v917
        %921 = vrot.lane.b32.xlu0 %v919, 126
        %v922 = vpop.permute.xlu0 %921
        %v923 = vrot.slane %v922, 2
        %vm924 = vcmask 1031168
        %v925 = vsel %vm924, %v922, %v923
        %v927 = vadd.f32 %v827, %v925
        %928 = vset.pattern.permute.xlu0 3
        %929 = vperm.xlu0 %928, %v828
        %v930 = vpop.permute.xlu0 %929
        %v932 = vunpack.c.l.s4 269488144
        %v933 = vunpack.c.0.s8 %v932
        %v934 = vlaneseq
        %v935 = vshrl.u32 %v934, 7
        %v936 = vsub.s32 %v933, %v935
        %v937 = vrot.slane %v930, %v936
        %v939 = vmul.f32 %v829, %v937
        %v940 = vadd.f32 %v939, 0.0
        %941 = vset.pattern.permute.xlu0 8
        %942 = vperm.xlu0 %941, %v828
        %v943 = vpop.permute.xlu0 %942
        %v945 = vunpack.c.l.s4 269488144
        %v946 = vunpack.c.0.s8 %v945
        %v947 = vlaneseq
        %v948 = vshrl.u32 %v947, 7
        %v949 = vsub.s32 %v946, %v948
        %v950 = vrot.slane %v943, %v949
        %v952 = vmul.f32 %v829, %v950
        %954 = vrot.lane.b32.xlu0 %v952, 112
        %v955 = vpop.permute.xlu0 %954
        %v956 = vrot.slane %v955, 2
        %v957 = vsel %vm617, %v955, %v956
        %v959 = vadd.f32 %v940, %v957
        %960 = vset.pattern.permute.xlu0 13
        %961 = vperm.xlu0 %960, %v828
        %v962 = vpop.permute.xlu0 %961
        %v964 = vunpack.c.l.s4 269488144
        %v965 = vunpack.c.0.s8 %v964
        %v966 = vlaneseq
        %v967 = vshrl.u32 %v966, 7
        %v968 = vsub.s32 %v965, %v967
        %v969 = vrot.slane %v962, %v968
        %v971 = vmul.f32 %v829, %v969
        %973 = vrot.lane.b32.xlu0 %v971, 96
        %v974 = vpop.permute.xlu0 %973
        %v975 = vrot.slane %v974, 2
        %v976 = vsel %vm637, %v974, %v975
        %v978 = vadd.f32 %v959, %v976
        %979 = vset.pattern.permute.xlu0 18
        %980 = vperm.xlu0 %979, %v828
        %v981 = vpop.permute.xlu0 %980
        %v983 = vunpack.c.l.s4 269488144
        %v984 = vunpack.c.0.s8 %v983
        %v985 = vlaneseq
        %v986 = vshrl.u32 %v985, 7
        %v987 = vsub.s32 %v984, %v986
        %v988 = vrot.slane %v981, %v987
        %v990 = vmul.f32 %v829, %v988
        %992 = vrot.lane.b32.xlu0 %v990, 80
        %v993 = vpop.permute.xlu0 %992
        %v994 = vrot.slane %v993, 2
        %v995 = vsel %vm657, %v993, %v994
        %v997 = vadd.f32 %v978, %v995
        %998 = vset.pattern.permute.xlu0 23
        %999 = vperm.xlu0 %998, %v828
        %v1000 = vpop.permute.xlu0 %999
        %v1002 = vunpack.c.l.s4 269488144
        %v1003 = vunpack.c.0.s8 %v1002
        %v1004 = vlaneseq
        %v1005 = vshrl.u32 %v1004, 7
        %v1006 = vsub.s32 %v1003, %v1005
        %v1007 = vrot.slane %v1000, %v1006
        %v1009 = vmul.f32 %v829, %v1007
        %1011 = vrot.lane.b32.xlu0 %v1009, 64
        %v1012 = vpop.permute.xlu0 %1011
        %v1013 = vrot.slane %v1012, 2
        %v1014 = vsel %vm677, %v1012, %v1013
        %v1016 = vadd.f32 %v997, %v1014
        %s1017 = scalar_lea.vmem %s10, 3
        %v1018 = vld [vmem:[%s1017] ss:$8 sm:$0x3]
        %v1020 = vlaneseq
        %v1021 = vshrl.u32 %v1020, 7
        %v1022 = vsub.s32 0, %v1021
        %v1023 = vrot.slane %v1018, %v1022
        %v1024 = vlaneseq
        %v1025 = vshrl.u32 %v1024, 7
        %v1026 = vsub.s32 1, %v1025
        %v1027 = vrot.slane %v1018, %v1026
        %v1028 = vcombine.low %v1023, %v1027
        %v1030 = vunpack.c.l.s4 1983009808
        %v1031 = vunpack.c.0.s8 %v1030
        %v1032 = vlaneseq
        %v1033 = vshrl.u32 %v1032, 7
        %v1034 = vsub.s32 %v1031, %v1033
        %v1035 = vrot.slane %v1028, %v1034
        %1036 = vrot.lane.b32.xlu0 %v1035, 3
        %v1037 = vpop.permute.xlu0 %1036
        %v1038 = vrot.slane %v1037, 6
        %vm1039 = vcmask 23552
        %v1040 = vsel %vm1039, %v1038, %v1037
        %v1042 = vmul.f32 %v1016, %v1040
        %1044 = vrot.lane.b32.xlu0 %v1042, 125
        %v1045 = vpop.permute.xlu0 %1044
        %v1046 = vrot.slane %v1045, 2
        %vm1047 = vcmask 1022976
        %v1048 = vsel %vm1047, %v1045, %v1046
        %v1050 = vadd.f32 %v927, %v1048
        %v1051 = vld [vmem:[%s3] sm:$0x3]
        %v1052 = vld [vmem:[#allocation2] sm:$0x3f]
        %1054 = vset.pattern.permute.xlu0 4
        %1055 = vperm.xlu0 %1054, %v1051
        %v1056 = vpop.permute.xlu0 %1055
        %v1058 = vunpack.c.l.s4 269488144
        %v1059 = vunpack.c.0.s8 %v1058
        %v1060 = vlaneseq
        %v1061 = vshrl.u32 %v1060, 7
        %v1062 = vsub.s32 %v1059, %v1061
        %v1063 = vrot.slane %v1056, %v1062
        %v1065 = vmul.f32 %v1052, %v1063
        %v1066 = vadd.f32 %v1065, 0.0
        %1067 = vset.pattern.permute.xlu0 9
        %1068 = vperm.xlu0 %1067, %v1051
        %v1069 = vpop.permute.xlu0 %1068
        %v1071 = vunpack.c.l.s4 269488144
        %v1072 = vunpack.c.0.s8 %v1071
        %v1073 = vlaneseq
        %v1074 = vshrl.u32 %v1073, 7
        %v1075 = vsub.s32 %v1072, %v1074
        %v1076 = vrot.slane %v1069, %v1075
        %v1078 = vmul.f32 %v1052, %v1076
        %1080 = vrot.lane.b32.xlu0 %v1078, 112
        %v1081 = vpop.permute.xlu0 %1080
        %v1082 = vrot.slane %v1081, 2
        %v1083 = vsel %vm617, %v1081, %v1082
        %v1085 = vadd.f32 %v1066, %v1083
        %1086 = vset.pattern.permute.xlu0 14
        %1087 = vperm.xlu0 %1086, %v1051
        %v1088 = vpop.permute.xlu0 %1087
        %v1090 = vunpack.c.l.s4 269488144
        %v1091 = vunpack.c.0.s8 %v1090
        %v1092 = vlaneseq
        %v1093 = vshrl.u32 %v1092, 7
        %v1094 = vsub.s32 %v1091, %v1093
        %v1095 = vrot.slane %v1088, %v1094
        %v1097 = vmul.f32 %v1052, %v1095
        %1099 = vrot.lane.b32.xlu0 %v1097, 96
        %v1100 = vpop.permute.xlu0 %1099
        %v1101 = vrot.slane %v1100, 2
        %v1102 = vsel %vm637, %v1100, %v1101
        %v1104 = vadd.f32 %v1085, %v1102
        %1105 = vset.pattern.permute.xlu0 19
        %1106 = vperm.xlu0 %1105, %v1051
        %v1107 = vpop.permute.xlu0 %1106
        %v1109 = vunpack.c.l.s4 269488144
        %v1110 = vunpack.c.0.s8 %v1109
        %v1111 = vlaneseq
        %v1112 = vshrl.u32 %v1111, 7
        %v1113 = vsub.s32 %v1110, %v1112
        %v1114 = vrot.slane %v1107, %v1113
        %v1116 = vmul.f32 %v1052, %v1114
        %1118 = vrot.lane.b32.xlu0 %v1116, 80
        %v1119 = vpop.permute.xlu0 %1118
        %v1120 = vrot.slane %v1119, 2
        %v1121 = vsel %vm657, %v1119, %v1120
        %v1123 = vadd.f32 %v1104, %v1121
        %1124 = vset.pattern.permute.xlu0 24
        %1125 = vperm.xlu0 %1124, %v1051
        %v1126 = vpop.permute.xlu0 %1125
        %v1128 = vunpack.c.l.s4 269488144
        %v1129 = vunpack.c.0.s8 %v1128
        %v1130 = vlaneseq
        %v1131 = vshrl.u32 %v1130, 7
        %v1132 = vsub.s32 %v1129, %v1131
        %v1133 = vrot.slane %v1126, %v1132
        %v1135 = vmul.f32 %v1052, %v1133
        %1137 = vrot.lane.b32.xlu0 %v1135, 64
        %v1138 = vpop.permute.xlu0 %1137
        %v1139 = vrot.slane %v1138, 2
        %v1140 = vsel %vm677, %v1138, %v1139
        %v1142 = vadd.f32 %v1123, %v1140
        %s1143 = scalar_lea.vmem %s10, 4
        %v1144 = vld [vmem:[%s1143] ss:$8 sm:$0x3]
        %v1146 = vlaneseq
        %v1147 = vshrl.u32 %v1146, 7
        %v1148 = vsub.s32 0, %v1147
        %v1149 = vrot.slane %v1144, %v1148
        %v1150 = vlaneseq
        %v1151 = vshrl.u32 %v1150, 7
        %v1152 = vsub.s32 1, %v1151
        %v1153 = vrot.slane %v1144, %v1152
        %v1154 = vcombine.low %v1149, %v1153
        %v1156 = vunpack.c.l.s4 1983009808
        %v1157 = vunpack.c.0.s8 %v1156
        %v1158 = vlaneseq
        %v1159 = vshrl.u32 %v1158, 7
        %v1160 = vsub.s32 %v1157, %v1159
        %v1161 = vrot.slane %v1154, %v1160
        %1162 = vrot.lane.b32.xlu0 %v1161, 4
        %v1163 = vpop.permute.xlu0 %1162
        %v1164 = vrot.slane %v1163, 6
        %vm1165 = vcmask 31744
        %v1166 = vsel %vm1165, %v1164, %v1163
        %v1168 = vmul.f32 %v1142, %v1166
        %1170 = vrot.lane.b32.xlu0 %v1168, 124
        %v1171 = vpop.permute.xlu0 %1170
        %v1172 = vrot.slane %v1171, 2
        %vm1173 = vcmask 1014784
        %v1174 = vsel %vm1173, %v1171, %v1172
        %v1176 = vadd.f32 %v1050, %v1174
        %v1177 = vld [vmem:[%s4] sm:$0x3]
        %1179 = vset.pattern.permute.xlu0 0
        %1180 = vperm.xlu0 %1179, %v1177
        %v1181 = vpop.permute.xlu0 %1180
        %v1183 = vunpack.c.l.s4 269488144
        %v1184 = vunpack.c.0.s8 %v1183
        %v1185 = vlaneseq
        %v1186 = vshrl.u32 %v1185, 7
        %v1187 = vsub.s32 %v1184, %v1186
        %v1188 = vrot.slane %v1181, %v1187
        %v1190 = vadd.f32 %v1176, %v1188
        %v1191 = vxor.u32 %v1190, 2147483648
        %v1192 = vmul.f32 %v1191, 1.442695
        %v1193 = vpow.pop %v1192
        %v1194 = vadd.f32 %v1193, 1.0
        %v1195 = vrcp.pop %v1194
        %v1196 = vmul.f32 1.0, %v1195
        %v1197 = vmul.f32 %v1190, %v1196
        %v1198 = vld [vmem:[%s5] sm:$0xf]
        %1200 = vset.pattern.permute.xlu0 0
        %1201 = vperm.xlu0 %1200, %v1198
        %v1202 = vpop.permute.xlu0 %1201
        %v1204 = vlaneseq
        %v1205 = vshrl.u32 %v1204, 7
        %v1206 = vsub.s32 0, %v1205
        %v1207 = vrot.slane %v555, %v1206
        %v1208 = vlaneseq
        %v1209 = vshrl.u32 %v1208, 7
        %v1210 = vsub.s32 0, %v1209
        %v1211 = vrot.slane %v556, %v1210
        %v1212 = vmul.f32 %v1202, %v1207
        %v1213 = vmul.f32 %v1202, %v1211
        %v1214 = vadd.f32 %v1212, 0.0
        %v1215 = vadd.f32 %v1213, 0.0
        %1216 = vset.pattern.permute.xlu0 1
        %1217 = vperm.xlu0 %1216, %v1198
        %v1218 = vpop.permute.xlu0 %1217
        %v1220 = vlaneseq
        %v1221 = vshrl.u32 %v1220, 7
        %v1222 = vsub.s32 1, %v1221
        %v1223 = vrot.slane %v555, %v1222
        %v1224 = vlaneseq
        %v1225 = vshrl.u32 %v1224, 7
        %v1226 = vsub.s32 1, %v1225
        %v1227 = vrot.slane %v556, %v1226
        %v1228 = vmul.f32 %v1218, %v1223
        %v1229 = vmul.f32 %v1218, %v1227
        %v1230 = vadd.f32 %v1214, %v1228
        %v1231 = vadd.f32 %v1215, %v1229
        %v1232 = vld [vmem:[%s6] sm:$0xf]
        %1234 = vset.pattern.permute.xlu0 0
        %1235 = vperm.xlu0 %1234, %v1232
        %v1236 = vpop.permute.xlu0 %1235
        %v1239 = vlaneseq
        %v1240 = vshrl.u32 %v1239, 7
        %v1241 = vsub.s32 0, %v1240
        %v1242 = vrot.slane %v1197, %v1241
        %v1243 = vlaneseq
        %v1244 = vshrl.u32 %v1243, 7
        %v1245 = vsub.s32 2, %v1244
        %v1246 = vrot.slane %v1197, %v1245
        %v1249 = vlaneseq
        %v1250 = vshrl.u32 %v1249, 7
        %v1251 = vsub.s32 0, %v1250
        %v1252 = vrot.slane %v1242, %v1251
        %v1253 = vlaneseq
        %v1254 = vshrl.u32 %v1253, 7
        %v1255 = vsub.s32 0, %v1254
        %v1256 = vrot.slane %v1246, %v1255
        %v1257 = vmul.f32 %v1236, %v1252
        %v1258 = vmul.f32 %v1236, %v1256
        %v1259 = vadd.f32 %v1257, 0.0
        %v1260 = vadd.f32 %v1258, 0.0
        %1261 = vset.pattern.permute.xlu0 1
        %1262 = vperm.xlu0 %1261, %v1232
        %v1263 = vpop.permute.xlu0 %1262
        %v1265 = vlaneseq
        %v1266 = vshrl.u32 %v1265, 7
        %v1267 = vsub.s32 1, %v1266
        %v1268 = vrot.slane %v1197, %v1267
        %v1269 = vlaneseq
        %v1270 = vshrl.u32 %v1269, 7
        %v1271 = vsub.s32 3, %v1270
        %v1272 = vrot.slane %v1197, %v1271
        %v1275 = vlaneseq
        %v1276 = vshrl.u32 %v1275, 7
        %v1277 = vsub.s32 1, %v1276
        %v1278 = vrot.slane %v1268, %v1277
        %v1279 = vlaneseq
        %v1280 = vshrl.u32 %v1279, 7
        %v1281 = vsub.s32 1, %v1280
        %v1282 = vrot.slane %v1272, %v1281
        %v1283 = vmul.f32 %v1263, %v1278
        %v1284 = vmul.f32 %v1263, %v1282
        %v1285 = vadd.f32 %v1259, %v1283
        %v1286 = vadd.f32 %v1260, %v1284
        %v1287 = vadd.f32 %v1230, %v1285
        %v1288 = vadd.f32 %v1231, %v1286
        %v1289 = vld [vmem:[%s7] sm:$0xf]
        %1291 = vset.pattern.permute.xlu0 0
        %1292 = vperm.xlu0 %1291, %v1289
        %v1293 = vpop.permute.xlu0 %1292
        %v1295 = vadd.f32 %v1287, %v1293
        %v1296 = vadd.f32 %v1288, %v1293
        %1297 = vst [vmem:[#allocation3] sm:$0xff] 0.0
        %vm1298 = vcmask 551936
        %1299 = vst.msk [vmem:[#allocation3 + $0x8] sm:$0xf] %vm1298, 0.0
        %v1302 = vcombine.low %v1295, %v1296
        %1303 = vrot.lane.b32.xlu0 %v1302, 34
        %v1304 = vpop.permute.xlu0 %1303
        %v1305 = vrot.slane %v1304, 4
        %v1306 = vsel %vm576, %v1305, %v1304
        %vm1309 = vcmask 1043728
        %vm1310 = vcmask 1047556
        %vm1311 = vmor %vm1310, %vm1309
        %1312 = vst.msk [vmem:[#allocation3] sm:$0xff] %vm1311, %v1306
        %vm1313 = vcmask 273408
        %1314 = vst.msk [vmem:[#allocation3 + $0x8] sm:$0xf] %vm1313, %v1305
        %v1315 = vld [vmem:[%s8] sm:$0xf]
        %v1316 = vld [vmem:[#allocation3] sm:$0xff]
        %1318 = vset.pattern.permute.xlu0 0
        %1319 = vperm.xlu0 %1318, %v1315
        %v1320 = vpop.permute.xlu0 %1319
        %v1322 = vunpack.c.l.s4 839922192
        %v1323 = vunpack.c.0.s8 %v1322
        %v1324 = vlaneseq
        %v1325 = vshrl.u32 %v1324, 7
        %v1326 = vsub.s32 %v1323, %v1325
        %v1327 = vrot.slane %v1320, %v1326
        %v1329 = vmul.f32 %v1316, %v1327
        %v1330 = vadd.f32 %v1329, 0.0
        %v1331 = vld [vmem:[#allocation3] sm:$0xff]
        %v1332 = vld [vmem:[#allocation3 + $0x8] sm:$0xf]
        %1333 = vset.pattern.permute.xlu0 5
        %1334 = vperm.xlu0 %1333, %v1315
        %v1335 = vpop.permute.xlu0 %1334
        %v1337 = vunpack.c.l.s4 839922192
        %v1338 = vunpack.c.0.s8 %v1337
        %v1339 = vlaneseq
        %v1340 = vshrl.u32 %v1339, 7
        %v1341 = vsub.s32 %v1338, %v1340
        %v1342 = vrot.slane %v1335, %v1341
        %v1344 = vmul.f32 %v1331, %v1342
        %v1345 = vmul.f32 %v1332, %v1342
        %1348 = vrot.lane.b32.xlu0 %v1344, 112
        %v1349 = vpop.permute.xlu0 %1348
        %1350 = vrot.lane.b32.xlu0 %v1345, 112
        %v1351 = vpop.permute.xlu0 %1350
        %v1352 = vrot.slane %v1349, 4
        %v1353 = vrot.slane %v1351, 4
        %vm1354 = vcmask 1043456
        %v1355 = vsel %vm1354, %v1352, %v1353
        %v1356 = vsel %vm617, %v1349, %v1355
        %v1358 = vadd.f32 %v1330, %v1356
        %1359 = vset.pattern.permute.xlu0 10
        %1360 = vperm.xlu0 %1359, %v1315
        %v1361 = vpop.permute.xlu0 %1360
        %v1363 = vunpack.c.l.s4 839922192
        %v1364 = vunpack.c.0.s8 %v1363
        %v1365 = vlaneseq
        %v1366 = vshrl.u32 %v1365, 7
        %v1367 = vsub.s32 %v1364, %v1366
        %v1368 = vrot.slane %v1361, %v1367
        %v1370 = vmul.f32 %v1331, %v1368
        %v1371 = vmul.f32 %v1332, %v1368
        %1374 = vrot.lane.b32.xlu0 %v1370, 96
        %v1375 = vpop.permute.xlu0 %1374
        %1376 = vrot.lane.b32.xlu0 %v1371, 96
        %v1377 = vpop.permute.xlu0 %1376
        %v1378 = vrot.slane %v1375, 4
        %v1379 = vrot.slane %v1377, 4
        %v1380 = vsel %vm1354, %v1378, %v1379
        %v1381 = vsel %vm637, %v1375, %v1380
        %v1383 = vadd.f32 %v1358, %v1381
        %1384 = vset.pattern.permute.xlu0 15
        %1385 = vperm.xlu0 %1384, %v1315
        %v1386 = vpop.permute.xlu0 %1385
        %v1388 = vunpack.c.l.s4 839922192
        %v1389 = vunpack.c.0.s8 %v1388
        %v1390 = vlaneseq
        %v1391 = vshrl.u32 %v1390, 7
        %v1392 = vsub.s32 %v1389, %v1391
        %v1393 = vrot.slane %v1386, %v1392
        %v1395 = vmul.f32 %v1331, %v1393
        %v1396 = vmul.f32 %v1332, %v1393
        %1399 = vrot.lane.b32.xlu0 %v1395, 80
        %v1400 = vpop.permute.xlu0 %1399
        %1401 = vrot.lane.b32.xlu0 %v1396, 80
        %v1402 = vpop.permute.xlu0 %1401
        %v1403 = vrot.slane %v1400, 4
        %v1404 = vrot.slane %v1402, 4
        %v1405 = vsel %vm1354, %v1403, %v1404
        %v1406 = vsel %vm657, %v1400, %v1405
        %v1408 = vadd.f32 %v1383, %v1406
        %1409 = vset.pattern.permute.xlu0 20
        %1410 = vperm.xlu0 %1409, %v1315
        %v1411 = vpop.permute.xlu0 %1410
        %v1413 = vunpack.c.l.s4 839922192
        %v1414 = vunpack.c.0.s8 %v1413
        %v1415 = vlaneseq
        %v1416 = vshrl.u32 %v1415, 7
        %v1417 = vsub.s32 %v1414, %v1416
        %v1418 = vrot.slane %v1411, %v1417
        %v1420 = vmul.f32 %v1331, %v1418
        %v1421 = vmul.f32 %v1332, %v1418
        %1424 = vrot.lane.b32.xlu0 %v1420, 64
        %v1425 = vpop.permute.xlu0 %1424
        %1426 = vrot.lane.b32.xlu0 %v1421, 64
        %v1427 = vpop.permute.xlu0 %1426
        %v1428 = vrot.slane %v1425, 4
        %v1429 = vrot.slane %v1427, 4
        %v1430 = vsel %vm1354, %v1428, %v1429
        %v1431 = vsel %vm677, %v1425, %v1430
        %v1433 = vadd.f32 %v1408, %v1431
        %v1434 = vld [vmem:[%s10] ss:$8 sm:$0x3]
        %v1436 = vlaneseq
        %v1437 = vshrl.u32 %v1436, 7
        %v1438 = vsub.s32 0, %v1437
        %v1439 = vrot.slane %v1434, %v1438
        %v1440 = vlaneseq
        %v1441 = vshrl.u32 %v1440, 7
        %v1442 = vsub.s32 1, %v1441
        %v1443 = vrot.slane %v1434, %v1442
        %v1444 = vcombine.low %v1439, %v1443
        %v1446 = vmul.f32 %v1433, %v1444
        %v1447 = vadd.f32 %v1446, 0.0
        %v1448 = vld [vmem:[%s8] sm:$0xf]
        %v1449 = vld [vmem:[#allocation3] sm:$0xff]
        %v1450 = vld [vmem:[#allocation3 + $0x8] sm:$0xf]
        %1452 = vset.pattern.permute.xlu0 1
        %1453 = vperm.xlu0 %1452, %v1448
        %v1454 = vpop.permute.xlu0 %1453
        %v1456 = vunpack.c.l.s4 839922192
        %v1457 = vunpack.c.0.s8 %v1456
        %v1458 = vlaneseq
        %v1459 = vshrl.u32 %v1458, 7
        %v1460 = vsub.s32 %v1457, %v1459
        %v1461 = vrot.slane %v1454, %v1460
        %v1463 = vmul.f32 %v1449, %v1461
        %v1464 = vmul.f32 %v1450, %v1461
        %v1465 = vadd.f32 %v1463, 0.0
        %v1466 = vadd.f32 %v1464, 0.0
        %1467 = vset.pattern.permute.xlu0 6
        %1468 = vperm.xlu0 %1467, %v1448
        %v1469 = vpop.permute.xlu0 %1468
        %v1471 = vunpack.c.l.s4 839922192
        %v1472 = vunpack.c.0.s8 %v1471
        %v1473 = vlaneseq
        %v1474 = vshrl.u32 %v1473, 7
        %v1475 = vsub.s32 %v1472, %v1474
        %v1476 = vrot.slane %v1469, %v1475
        %v1478 = vmul.f32 %v1449, %v1476
        %v1479 = vmul.f32 %v1450, %v1476
        %1482 = vrot.lane.b32.xlu0 %v1478, 112
        %v1483 = vpop.permute.xlu0 %1482
        %1484 = vrot.lane.b32.xlu0 %v1479, 112
        %v1485 = vpop.permute.xlu0 %1484
        %v1486 = vrot.slane %v1483, 4
        %v1487 = vrot.slane %v1485, 4
        %v1488 = vsel %vm1354, %v1486, %v1487
        %v1489 = vsel %vm617, %v1483, %v1488
        %v1492 = vadd.f32 %v1465, %v1489
        %v1493 = vadd.f32 %v1466, %v1485
        %1494 = vset.pattern.permute.xlu0 11
        %1495 = vperm.xlu0 %1494, %v1448
        %v1496 = vpop.permute.xlu0 %1495
        %v1498 = vunpack.c.l.s4 839922192
        %v1499 = vunpack.c.0.s8 %v1498
        %v1500 = vlaneseq
        %v1501 = vshrl.u32 %v1500, 7
        %v1502 = vsub.s32 %v1499, %v1501
        %v1503 = vrot.slane %v1496, %v1502
        %v1505 = vmul.f32 %v1449, %v1503
        %v1506 = vmul.f32 %v1450, %v1503
        %1509 = vrot.lane.b32.xlu0 %v1505, 96
        %v1510 = vpop.permute.xlu0 %1509
        %1511 = vrot.lane.b32.xlu0 %v1506, 96
        %v1512 = vpop.permute.xlu0 %1511
        %v1513 = vrot.slane %v1510, 4
        %v1514 = vrot.slane %v1512, 4
        %v1515 = vsel %vm1354, %v1513, %v1514
        %v1516 = vsel %vm637, %v1510, %v1515
        %v1519 = vadd.f32 %v1492, %v1516
        %v1520 = vadd.f32 %v1493, %v1512
        %1521 = vset.pattern.permute.xlu0 16
        %1522 = vperm.xlu0 %1521, %v1448
        %v1523 = vpop.permute.xlu0 %1522
        %v1525 = vunpack.c.l.s4 839922192
        %v1526 = vunpack.c.0.s8 %v1525
        %v1527 = vlaneseq
        %v1528 = vshrl.u32 %v1527, 7
        %v1529 = vsub.s32 %v1526, %v1528
        %v1530 = vrot.slane %v1523, %v1529
        %v1532 = vmul.f32 %v1449, %v1530
        %v1533 = vmul.f32 %v1450, %v1530
        %1536 = vrot.lane.b32.xlu0 %v1532, 80
        %v1537 = vpop.permute.xlu0 %1536
        %1538 = vrot.lane.b32.xlu0 %v1533, 80
        %v1539 = vpop.permute.xlu0 %1538
        %v1540 = vrot.slane %v1537, 4
        %v1541 = vrot.slane %v1539, 4
        %v1542 = vsel %vm1354, %v1540, %v1541
        %v1543 = vsel %vm657, %v1537, %v1542
        %v1546 = vadd.f32 %v1519, %v1543
        %v1547 = vadd.f32 %v1520, %v1539
        %1548 = vset.pattern.permute.xlu0 21
        %1549 = vperm.xlu0 %1548, %v1448
        %v1550 = vpop.permute.xlu0 %1549
        %v1552 = vunpack.c.l.s4 839922192
        %v1553 = vunpack.c.0.s8 %v1552
        %v1554 = vlaneseq
        %v1555 = vshrl.u32 %v1554, 7
        %v1556 = vsub.s32 %v1553, %v1555
        %v1557 = vrot.slane %v1550, %v1556
        %v1559 = vmul.f32 %v1449, %v1557
        %v1560 = vmul.f32 %v1450, %v1557
        %1563 = vrot.lane.b32.xlu0 %v1559, 64
        %v1564 = vpop.permute.xlu0 %1563
        %1565 = vrot.lane.b32.xlu0 %v1560, 64
        %v1566 = vpop.permute.xlu0 %1565
        %v1567 = vrot.slane %v1564, 4
        %v1568 = vrot.slane %v1566, 4
        %v1569 = vsel %vm1354, %v1567, %v1568
        %v1570 = vsel %vm677, %v1564, %v1569
        %v1573 = vadd.f32 %v1546, %v1570
        %v1574 = vadd.f32 %v1547, %v1566
        %v1575 = vld [vmem:[%s794] ss:$8 sm:$0x3]
        %v1577 = vlaneseq
        %v1578 = vshrl.u32 %v1577, 7
        %v1579 = vsub.s32 0, %v1578
        %v1580 = vrot.slane %v1575, %v1579
        %v1581 = vlaneseq
        %v1582 = vshrl.u32 %v1581, 7
        %v1583 = vsub.s32 1, %v1582
        %v1584 = vrot.slane %v1575, %v1583
        %v1585 = vcombine.low %v1580, %v1584
        %1586 = vrot.lane.b32.xlu0 %v1585, 1
        %v1587 = vpop.permute.xlu0 %1586
        %v1588 = vrot.slane %v1587, 4
        %v1589 = vsel %vm816, %v1588, %v1587
        %v1592 = vmul.f32 %v1573, %v1589
        %v1593 = vmul.f32 %v1574, %v1588
        %1596 = vrot.lane.b32.xlu0 %v1592, 127
        %v1597 = vpop.permute.xlu0 %1596
        %1598 = vrot.lane.b32.xlu0 %v1593, 127
        %v1599 = vpop.permute.xlu0 %1598
        %v1600 = vrot.slane %v1597, 4
        %v1601 = vrot.slane %v1599, 4
        %v1602 = vsel %vm1354, %v1600, %v1601
        %v1603 = vsel %vm824, %v1597, %v1602
        %v1605 = vadd.f32 %v1447, %v1603
        %v1606 = vld [vmem:[%s8] sm:$0xf]
        %v1607 = vld [vmem:[#allocation3] sm:$0xff]
        %v1608 = vld [vmem:[#allocation3 + $0x8] sm:$0xf]
        %1610 = vset.pattern.permute.xlu0 2
        %1611 = vperm.xlu0 %1610, %v1606
        %v1612 = vpop.permute.xlu0 %1611
        %v1614 = vunpack.c.l.s4 839922192
        %v1615 = vunpack.c.0.s8 %v1614
        %v1616 = vlaneseq
        %v1617 = vshrl.u32 %v1616, 7
        %v1618 = vsub.s32 %v1615, %v1617
        %v1619 = vrot.slane %v1612, %v1618
        %v1621 = vmul.f32 %v1607, %v1619
        %v1622 = vmul.f32 %v1608, %v1619
        %v1623 = vadd.f32 %v1621, 0.0
        %v1624 = vadd.f32 %v1622, 0.0
        %1625 = vset.pattern.permute.xlu0 7
        %1626 = vperm.xlu0 %1625, %v1606
        %v1627 = vpop.permute.xlu0 %1626
        %v1629 = vunpack.c.l.s4 839922192
        %v1630 = vunpack.c.0.s8 %v1629
        %v1631 = vlaneseq
        %v1632 = vshrl.u32 %v1631, 7
        %v1633 = vsub.s32 %v1630, %v1632
        %v1634 = vrot.slane %v1627, %v1633
        %v1636 = vmul.f32 %v1607, %v1634
        %v1637 = vmul.f32 %v1608, %v1634
        %1640 = vrot.lane.b32.xlu0 %v1636, 112
        %v1641 = vpop.permute.xlu0 %1640
        %1642 = vrot.lane.b32.xlu0 %v1637, 112
        %v1643 = vpop.permute.xlu0 %1642
        %v1644 = vrot.slane %v1641, 4
        %v1645 = vrot.slane %v1643, 4
        %v1646 = vsel %vm1354, %v1644, %v1645
        %v1647 = vsel %vm617, %v1641, %v1646
        %v1650 = vadd.f32 %v1623, %v1647
        %v1651 = vadd.f32 %v1624, %v1643
        %1652 = vset.pattern.permute.xlu0 12
        %1653 = vperm.xlu0 %1652, %v1606
        %v1654 = vpop.permute.xlu0 %1653
        %v1656 = vunpack.c.l.s4 839922192
        %v1657 = vunpack.c.0.s8 %v1656
        %v1658 = vlaneseq
        %v1659 = vshrl.u32 %v1658, 7
        %v1660 = vsub.s32 %v1657, %v1659
        %v1661 = vrot.slane %v1654, %v1660
        %v1663 = vmul.f32 %v1607, %v1661
        %v1664 = vmul.f32 %v1608, %v1661
        %1667 = vrot.lane.b32.xlu0 %v1663, 96
        %v1668 = vpop.permute.xlu0 %1667
        %1669 = vrot.lane.b32.xlu0 %v1664, 96
        %v1670 = vpop.permute.xlu0 %1669
        %v1671 = vrot.slane %v1668, 4
        %v1672 = vrot.slane %v1670, 4
        %v1673 = vsel %vm1354, %v1671, %v1672
        %v1674 = vsel %vm637, %v1668, %v1673
        %v1677 = vadd.f32 %v1650, %v1674
        %v1678 = vadd.f32 %v1651, %v1670
        %1679 = vset.pattern.permute.xlu0 17
        %1680 = vperm.xlu0 %1679, %v1606
        %v1681 = vpop.permute.xlu0 %1680
        %v1683 = vunpack.c.l.s4 839922192
        %v1684 = vunpack.c.0.s8 %v1683
        %v1685 = vlaneseq
        %v1686 = vshrl.u32 %v1685, 7
        %v1687 = vsub.s32 %v1684, %v1686
        %v1688 = vrot.slane %v1681, %v1687
        %v1690 = vmul.f32 %v1607, %v1688
        %v1691 = vmul.f32 %v1608, %v1688
        %1694 = vrot.lane.b32.xlu0 %v1690, 80
        %v1695 = vpop.permute.xlu0 %1694
        %1696 = vrot.lane.b32.xlu0 %v1691, 80
        %v1697 = vpop.permute.xlu0 %1696
        %v1698 = vrot.slane %v1695, 4
        %v1699 = vrot.slane %v1697, 4
        %v1700 = vsel %vm1354, %v1698, %v1699
        %v1701 = vsel %vm657, %v1695, %v1700
        %v1704 = vadd.f32 %v1677, %v1701
        %v1705 = vadd.f32 %v1678, %v1697
        %1706 = vset.pattern.permute.xlu0 22
        %1707 = vperm.xlu0 %1706, %v1606
        %v1708 = vpop.permute.xlu0 %1707
        %v1710 = vunpack.c.l.s4 839922192
        %v1711 = vunpack.c.0.s8 %v1710
        %v1712 = vlaneseq
        %v1713 = vshrl.u32 %v1712, 7
        %v1714 = vsub.s32 %v1711, %v1713
        %v1715 = vrot.slane %v1708, %v1714
        %v1717 = vmul.f32 %v1607, %v1715
        %v1718 = vmul.f32 %v1608, %v1715
        %1721 = vrot.lane.b32.xlu0 %v1717, 64
        %v1722 = vpop.permute.xlu0 %1721
        %1723 = vrot.lane.b32.xlu0 %v1718, 64
        %v1724 = vpop.permute.xlu0 %1723
        %v1725 = vrot.slane %v1722, 4
        %v1726 = vrot.slane %v1724, 4
        %v1727 = vsel %vm1354, %v1725, %v1726
        %v1728 = vsel %vm677, %v1722, %v1727
        %v1731 = vadd.f32 %v1704, %v1728
        %v1732 = vadd.f32 %v1705, %v1724
        %1735 = vrot.lane.b32.xlu0 %v1731, 126
        %v1736 = vpop.permute.xlu0 %1735
        %1737 = vrot.lane.b32.xlu0 %v1732, 126
        %v1738 = vpop.permute.xlu0 %1737
        %v1739 = vrot.slane %v1736, 4
        %v1740 = vrot.slane %v1738, 4
        %v1741 = vsel %vm1354, %v1739, %v1740
        %v1742 = vsel %vm924, %v1736, %v1741
        %v1744 = vadd.f32 %v1605, %v1742
        %1745 = vset.pattern.permute.xlu0 3
        %1746 = vperm.xlu0 %1745, %v1606
        %v1747 = vpop.permute.xlu0 %1746
        %v1749 = vunpack.c.l.s4 839922192
        %v1750 = vunpack.c.0.s8 %v1749
        %v1751 = vlaneseq
        %v1752 = vshrl.u32 %v1751, 7
        %v1753 = vsub.s32 %v1750, %v1752
        %v1754 = vrot.slane %v1747, %v1753
        %v1756 = vmul.f32 %v1607, %v1754
        %v1757 = vmul.f32 %v1608, %v1754
        %v1758 = vadd.f32 %v1756, 0.0
        %v1759 = vadd.f32 %v1757, 0.0
        %1760 = vset.pattern.permute.xlu0 8
        %1761 = vperm.xlu0 %1760, %v1606
        %v1762 = vpop.permute.xlu0 %1761
        %v1764 = vunpack.c.l.s4 839922192
        %v1765 = vunpack.c.0.s8 %v1764
        %v1766 = vlaneseq
        %v1767 = vshrl.u32 %v1766, 7
        %v1768 = vsub.s32 %v1765, %v1767
        %v1769 = vrot.slane %v1762, %v1768
        %v1771 = vmul.f32 %v1607, %v1769
        %v1772 = vmul.f32 %v1608, %v1769
        %1775 = vrot.lane.b32.xlu0 %v1771, 112
        %v1776 = vpop.permute.xlu0 %1775
        %1777 = vrot.lane.b32.xlu0 %v1772, 112
        %v1778 = vpop.permute.xlu0 %1777
        %v1779 = vrot.slane %v1776, 4
        %v1780 = vrot.slane %v1778, 4
        %v1781 = vsel %vm1354, %v1779, %v1780
        %v1782 = vsel %vm617, %v1776, %v1781
        %v1785 = vadd.f32 %v1758, %v1782
        %v1786 = vadd.f32 %v1759, %v1778
        %1787 = vset.pattern.permute.xlu0 13
        %1788 = vperm.xlu0 %1787, %v1606
        %v1789 = vpop.permute.xlu0 %1788
        %v1791 = vunpack.c.l.s4 839922192
        %v1792 = vunpack.c.0.s8 %v1791
        %v1793 = vlaneseq
        %v1794 = vshrl.u32 %v1793, 7
        %v1795 = vsub.s32 %v1792, %v1794
        %v1796 = vrot.slane %v1789, %v1795
        %v1798 = vmul.f32 %v1607, %v1796
        %v1799 = vmul.f32 %v1608, %v1796
        %1802 = vrot.lane.b32.xlu0 %v1798, 96
        %v1803 = vpop.permute.xlu0 %1802
        %1804 = vrot.lane.b32.xlu0 %v1799, 96
        %v1805 = vpop.permute.xlu0 %1804
        %v1806 = vrot.slane %v1803, 4
        %v1807 = vrot.slane %v1805, 4
        %v1808 = vsel %vm1354, %v1806, %v1807
        %v1809 = vsel %vm637, %v1803, %v1808
        %v1812 = vadd.f32 %v1785, %v1809
        %v1813 = vadd.f32 %v1786, %v1805
        %1814 = vset.pattern.permute.xlu0 18
        %1815 = vperm.xlu0 %1814, %v1606
        %v1816 = vpop.permute.xlu0 %1815
        %v1818 = vunpack.c.l.s4 839922192
        %v1819 = vunpack.c.0.s8 %v1818
        %v1820 = vlaneseq
        %v1821 = vshrl.u32 %v1820, 7
        %v1822 = vsub.s32 %v1819, %v1821
        %v1823 = vrot.slane %v1816, %v1822
        %v1825 = vmul.f32 %v1607, %v1823
        %v1826 = vmul.f32 %v1608, %v1823
        %1829 = vrot.lane.b32.xlu0 %v1825, 80
        %v1830 = vpop.permute.xlu0 %1829
        %1831 = vrot.lane.b32.xlu0 %v1826, 80
        %v1832 = vpop.permute.xlu0 %1831
        %v1833 = vrot.slane %v1830, 4
        %v1834 = vrot.slane %v1832, 4
        %v1835 = vsel %vm1354, %v1833, %v1834
        %v1836 = vsel %vm657, %v1830, %v1835
        %v1839 = vadd.f32 %v1812, %v1836
        %v1840 = vadd.f32 %v1813, %v1832
        %1841 = vset.pattern.permute.xlu0 23
        %1842 = vperm.xlu0 %1841, %v1606
        %v1843 = vpop.permute.xlu0 %1842
        %v1845 = vunpack.c.l.s4 839922192
        %v1846 = vunpack.c.0.s8 %v1845
        %v1847 = vlaneseq
        %v1848 = vshrl.u32 %v1847, 7
        %v1849 = vsub.s32 %v1846, %v1848
        %v1850 = vrot.slane %v1843, %v1849
        %v1852 = vmul.f32 %v1607, %v1850
        %v1853 = vmul.f32 %v1608, %v1850
        %1856 = vrot.lane.b32.xlu0 %v1852, 64
        %v1857 = vpop.permute.xlu0 %1856
        %1858 = vrot.lane.b32.xlu0 %v1853, 64
        %v1859 = vpop.permute.xlu0 %1858
        %v1860 = vrot.slane %v1857, 4
        %v1861 = vrot.slane %v1859, 4
        %v1862 = vsel %vm1354, %v1860, %v1861
        %v1863 = vsel %vm677, %v1857, %v1862
        %v1866 = vadd.f32 %v1839, %v1863
        %v1867 = vadd.f32 %v1840, %v1859
        %v1868 = vld [vmem:[%s1017] ss:$8 sm:$0x3]
        %v1870 = vlaneseq
        %v1871 = vshrl.u32 %v1870, 7
        %v1872 = vsub.s32 0, %v1871
        %v1873 = vrot.slane %v1868, %v1872
        %v1874 = vlaneseq
        %v1875 = vshrl.u32 %v1874, 7
        %v1876 = vsub.s32 1, %v1875
        %v1877 = vrot.slane %v1868, %v1876
        %v1878 = vcombine.low %v1873, %v1877
        %1879 = vrot.lane.b32.xlu0 %v1878, 3
        %v1880 = vpop.permute.xlu0 %1879
        %v1881 = vrot.slane %v1880, 4
        %v1882 = vsel %vm1039, %v1881, %v1880
        %v1885 = vmul.f32 %v1866, %v1882
        %v1886 = vmul.f32 %v1867, %v1881
        %1889 = vrot.lane.b32.xlu0 %v1885, 125
        %v1890 = vpop.permute.xlu0 %1889
        %1891 = vrot.lane.b32.xlu0 %v1886, 125
        %v1892 = vpop.permute.xlu0 %1891
        %v1893 = vrot.slane %v1890, 4
        %v1894 = vrot.slane %v1892, 4
        %v1895 = vsel %vm1354, %v1893, %v1894
        %v1896 = vsel %vm1047, %v1890, %v1895
        %v1898 = vadd.f32 %v1744, %v1896
        %v1899 = vld [vmem:[%s8] sm:$0xf]
        %v1900 = vld [vmem:[#allocation3] sm:$0xff]
        %v1901 = vld [vmem:[#allocation3 + $0x8] sm:$0xf]
        %1903 = vset.pattern.permute.xlu0 4
        %1904 = vperm.xlu0 %1903, %v1899
        %v1905 = vpop.permute.xlu0 %1904
        %v1907 = vunpack.c.l.s4 839922192
        %v1908 = vunpack.c.0.s8 %v1907
        %v1909 = vlaneseq
        %v1910 = vshrl.u32 %v1909, 7
        %v1911 = vsub.s32 %v1908, %v1910
        %v1912 = vrot.slane %v1905, %v1911
        %v1914 = vmul.f32 %v1900, %v1912
        %v1915 = vmul.f32 %v1901, %v1912
        %v1916 = vadd.f32 %v1914, 0.0
        %v1917 = vadd.f32 %v1915, 0.0
        %1918 = vset.pattern.permute.xlu0 9
        %1919 = vperm.xlu0 %1918, %v1899
        %v1920 = vpop.permute.xlu0 %1919
        %v1922 = vunpack.c.l.s4 839922192
        %v1923 = vunpack.c.0.s8 %v1922
        %v1924 = vlaneseq
        %v1925 = vshrl.u32 %v1924, 7
        %v1926 = vsub.s32 %v1923, %v1925
        %v1927 = vrot.slane %v1920, %v1926
        %v1929 = vmul.f32 %v1900, %v1927
        %v1930 = vmul.f32 %v1901, %v1927
        %1933 = vrot.lane.b32.xlu0 %v1929, 112
        %v1934 = vpop.permute.xlu0 %1933
        %1935 = vrot.lane.b32.xlu0 %v1930, 112
        %v1936 = vpop.permute.xlu0 %1935
        %v1937 = vrot.slane %v1934, 4
        %v1938 = vrot.slane %v1936, 4
        %v1939 = vsel %vm1354, %v1937, %v1938
        %v1940 = vsel %vm617, %v1934, %v1939
        %v1943 = vadd.f32 %v1916, %v1940
        %v1944 = vadd.f32 %v1917, %v1936
        %1945 = vset.pattern.permute.xlu0 14
        %1946 = vperm.xlu0 %1945, %v1899
        %v1947 = vpop.permute.xlu0 %1946
        %v1949 = vunpack.c.l.s4 839922192
        %v1950 = vunpack.c.0.s8 %v1949
        %v1951 = vlaneseq
        %v1952 = vshrl.u32 %v1951, 7
        %v1953 = vsub.s32 %v1950, %v1952
        %v1954 = vrot.slane %v1947, %v1953
        %v1956 = vmul.f32 %v1900, %v1954
        %v1957 = vmul.f32 %v1901, %v1954
        %1960 = vrot.lane.b32.xlu0 %v1956, 96
        %v1961 = vpop.permute.xlu0 %1960
        %1962 = vrot.lane.b32.xlu0 %v1957, 96
        %v1963 = vpop.permute.xlu0 %1962
        %v1964 = vrot.slane %v1961, 4
        %v1965 = vrot.slane %v1963, 4
        %v1966 = vsel %vm1354, %v1964, %v1965
        %v1967 = vsel %vm637, %v1961, %v1966
        %v1970 = vadd.f32 %v1943, %v1967
        %v1971 = vadd.f32 %v1944, %v1963
        %1972 = vset.pattern.permute.xlu0 19
        %1973 = vperm.xlu0 %1972, %v1899
        %v1974 = vpop.permute.xlu0 %1973
        %v1976 = vunpack.c.l.s4 839922192
        %v1977 = vunpack.c.0.s8 %v1976
        %v1978 = vlaneseq
        %v1979 = vshrl.u32 %v1978, 7
        %v1980 = vsub.s32 %v1977, %v1979
        %v1981 = vrot.slane %v1974, %v1980
        %v1983 = vmul.f32 %v1900, %v1981
        %v1984 = vmul.f32 %v1901, %v1981
        %1987 = vrot.lane.b32.xlu0 %v1983, 80
        %v1988 = vpop.permute.xlu0 %1987
        %1989 = vrot.lane.b32.xlu0 %v1984, 80
        %v1990 = vpop.permute.xlu0 %1989
        %v1991 = vrot.slane %v1988, 4
        %v1992 = vrot.slane %v1990, 4
        %v1993 = vsel %vm1354, %v1991, %v1992
        %v1994 = vsel %vm657, %v1988, %v1993
        %v1997 = vadd.f32 %v1970, %v1994
        %v1998 = vadd.f32 %v1971, %v1990
        %1999 = vset.pattern.permute.xlu0 24
        %2000 = vperm.xlu0 %1999, %v1899
        %v2001 = vpop.permute.xlu0 %2000
        %v2003 = vunpack.c.l.s4 839922192
        %v2004 = vunpack.c.0.s8 %v2003
        %v2005 = vlaneseq
        %v2006 = vshrl.u32 %v2005, 7
        %v2007 = vsub.s32 %v2004, %v2006
        %v2008 = vrot.slane %v2001, %v2007
        %v2010 = vmul.f32 %v1900, %v2008
        %v2011 = vmul.f32 %v1901, %v2008
        %2014 = vrot.lane.b32.xlu0 %v2010, 64
        %v2015 = vpop.permute.xlu0 %2014
        %2016 = vrot.lane.b32.xlu0 %v2011, 64
        %v2017 = vpop.permute.xlu0 %2016
        %v2018 = vrot.slane %v2015, 4
        %v2019 = vrot.slane %v2017, 4
        %v2020 = vsel %vm1354, %v2018, %v2019
        %v2021 = vsel %vm677, %v2015, %v2020
        %v2024 = vadd.f32 %v1997, %v2021
        %v2025 = vadd.f32 %v1998, %v2017
        %v2026 = vld [vmem:[%s1143] ss:$8 sm:$0x3]
        %v2028 = vlaneseq
        %v2029 = vshrl.u32 %v2028, 7
        %v2030 = vsub.s32 0, %v2029
        %v2031 = vrot.slane %v2026, %v2030
        %v2032 = vlaneseq
        %v2033 = vshrl.u32 %v2032, 7
        %v2034 = vsub.s32 1, %v2033
        %v2035 = vrot.slane %v2026, %v2034
        %v2036 = vcombine.low %v2031, %v2035
        %2037 = vrot.lane.b32.xlu0 %v2036, 4
        %v2038 = vpop.permute.xlu0 %2037
        %v2039 = vrot.slane %v2038, 4
        %v2040 = vsel %vm1165, %v2039, %v2038
        %v2043 = vmul.f32 %v2024, %v2040
        %v2044 = vmul.f32 %v2025, %v2039
        %2047 = vrot.lane.b32.xlu0 %v2043, 124
        %v2048 = vpop.permute.xlu0 %2047
        %2049 = vrot.lane.b32.xlu0 %v2044, 124
        %v2050 = vpop.permute.xlu0 %2049
        %v2051 = vrot.slane %v2048, 4
        %v2052 = vrot.slane %v2050, 4
        %v2053 = vsel %vm1354, %v2051, %v2052
        %v2054 = vsel %vm1173, %v2048, %v2053
        %v2056 = vadd.f32 %v1898, %v2054
        %v2057 = vld [vmem:[%s9] sm:$0xf]
        %2059 = vset.pattern.permute.xlu0 0
        %2060 = vperm.xlu0 %2059, %v2057
        %v2061 = vpop.permute.xlu0 %2060
        %v2063 = vunpack.c.l.s4 839922192
        %v2064 = vunpack.c.0.s8 %v2063
        %v2065 = vlaneseq
        %v2066 = vshrl.u32 %v2065, 7
        %v2067 = vsub.s32 %v2064, %v2066
        %v2068 = vrot.slane %v2061, %v2067
        %v2070 = vadd.f32 %v2056, %v2068
        %v2071 = vadd.f32 %v1295, %v403
        %v2072 = vadd.f32 %v1296, %v404
        %2073 = vst [vmem:[%s402] sm:$0xf] %v2071
        %2074 = vst [vmem:[%s402 + $0x8] sm:$0xf] %v2072
        %v2077 = vcombine.high %v403, %v404
        %v2079 = vadd.f32 %v2070, %v2077
        %v2081 = vcombine.low %v2079, %v2079
        %2083 = vst [vmem:[%s402] sm:$0xf0] %v2081
        %2084 = vst [vmem:[%s402 + $0x8] sm:$0xf0] %v2079
        %s2085 = sand.u32 %s272, 1
        %s2086 = scalar_lea.sflag [#allocation6], %s2085
        %s2087 = sand.u32 %s272, 1
        %s2088 = smul.addr %s2087, 16
        %s2089 = scalar_lea.vmem [#allocation7], %s2088
        // Predicated region
        $region69: #{tpu_custom_call.1} parent=63 // pred_check
          %p2090 = pneg %p282
        $region70: #{tpu_custom_call.1} parent=63 // pred_check_branch
          %2092 = sbr.rel (%p2090) target = $region72
        $region71: #{tpu_custom_call.1} parent=63 // pred_region
          %s2094 = ssub.s32 256, 256
          %2095 = vsyncadd %s2086, %s2094
          %s2096 = smul.addr %s28, 2
          %s2097 = smul.addr %s2096, 128
          %s2098 = scalar_lea.hbm %s11, %s2097
          %s2100 = sshll.u32 %s2089, 4
          %s2101 = int_to_ptr.vmem [resolvable:$true] %s2100
          %2103 = dma.vmem_to_hbm [thread:$0]  %s2101, 256, %s2098, %s2086
        $region72: #{tpu_custom_call.1} parent=63 // pred_fallthru
          _
      $region64: #{tpu_custom_call.1} parent=5 // pred_fallthru
        _
      %p2104 = scmp.le.s32.totalorder 2, %s23
      // Predicated region
      $region73: #{tpu_custom_call.1} parent=5 // pred_check
        %p2105 = pneg %p2104
      $region74: #{tpu_custom_call.1} parent=5 // pred_check_branch
        %2107 = sbr.rel (%p2105) target = $region76
      $region75: #{tpu_custom_call.1} parent=5 // pred_region
        %s2108 = ssub.s32 %s23, 2
        // Predicated region
        $region77: #{tpu_custom_call.1} parent=75 // pred_check
          %p2109 = pneg %p288
        $region78: #{tpu_custom_call.1} parent=75 // pred_check_branch
          %2111 = sbr.rel (%p2109) target = $region80
        $region79: #{tpu_custom_call.1} parent=75 // pred_region
          %s2112 = sand.u32 %s273, 1
          %s2113 = scalar_lea.sflag [#allocation6], %s2112
          %s2114 = sand.u32 %s273, 1
          %s2115 = smul.addr %s2114, 16
          %s2116 = scalar_lea.vmem [#allocation7], %s2115
          %2117 = dma.done %s2113, 256
        $region80: #{tpu_custom_call.1} parent=75 // pred_fallthru
          _
      $region76: #{tpu_custom_call.1} parent=5 // pred_fallthru
        _
    $region6: #{tpu_custom_call.1} parent=1 // loop_footer
      %s27 = sadd.s32 1, %s23
    $region7: #{tpu_custom_call.1} parent=1 // loop_footer_branch
      %22 = sbr.rel target = $region3
    $region8: #{tpu_custom_call.1} parent=1 // loop_exit
      _
    %2118 = vsyncpa [#allocation5], 1
    %s2119 = scalar_lea.sflag [#allocation5], 1
    %2120 = vsyncpa %s2119, 1
    %2121 = vsyncpa [#allocation6], 1
    %s2122 = scalar_lea.sflag [#allocation6], 1
    %2123 = vsyncpa %s2122, 1

</llo_original>
